<compile_context>
chip_gen: v5e
topology: v5e:2x2
jax: 0.10.0
libtpu: 0.0.40
codegen_flags: <defaults>
</compile_context>

<pallas_src>
import functools

import jax
import jax.numpy as jnp
import numpy as np
from jax.experimental import pallas as pl
from jax.experimental.pallas import tpu as pltpu

_BN_EPS = 1e-5
_LANE = 128


def _gemm_affine_act_kernel(x_ref, w_ref, s_ref, t_ref, o_ref, *, act):
    """One M-tile of y = act((x @ w) * scale + shift); bf16 operands, f32 acc."""
    acc = jnp.dot(x_ref[...], w_ref[...], preferred_element_type=jnp.float32)
    y = acc * s_ref[...] + t_ref[...]
    if act == "relu":
        y = jnp.maximum(y, 0.0)
    elif act == "tanh":
        y = jnp.tanh(y)
    o_ref[...] = y.astype(o_ref.dtype)


def fused_gemm_affine_act(x, w, scale, shift, *, act="none",
                          out_dtype=jnp.float32, tm=256):
    """y = act((x @ w) * scale + shift) as a tiled, pipelined Pallas kernel."""
    M, K = x.shape
    K2, Nc = w.shape
    assert K == K2
    assert scale.shape == (Nc,) and shift.shape == (Nc,)

    # Lane-dense output: pad columns to a multiple of 128 (zero weights/affine).
    Np = ((Nc + _LANE - 1) // _LANE) * _LANE
    if Np != Nc:
        w = jnp.pad(w, ((0, 0), (0, Np - Nc)))
        scale = jnp.pad(scale, (0, Np - Nc))
        shift = jnp.pad(shift, (0, Np - Nc))

    # Tile rows; pad M so the grid divides evenly (last-tile handling).
    if M > tm:
        tm_eff = tm
        Mp = ((M + tm - 1) // tm) * tm
        if Mp != M:
            x = jnp.pad(x, ((0, Mp - M), (0, 0)))
    else:
        tm_eff = M          # whole-M block (allowed: equals the full array dim)
        Mp = M
    grid = (Mp // tm_eff,)

    x_bf = x.astype(jnp.bfloat16)
    w_bf = w.astype(jnp.bfloat16)
    s2 = scale.reshape(1, Np).astype(jnp.float32)
    t2 = shift.reshape(1, Np).astype(jnp.float32)

    out_bytes = Mp * Np * np.dtype(out_dtype).itemsize
    cost = pl.CostEstimate(
        flops=2 * Mp * K * Np,
        transcendentals=(Mp * Np) if act == "tanh" else 0,
        bytes_accessed=2 * (Mp * K + K * Np) + 8 * Np + out_bytes,
    )

    kernel = functools.partial(_gemm_affine_act_kernel, act=act)
    out = pl.pallas_call(
        kernel,
        out_shape=jax.ShapeDtypeStruct((Mp, Np), out_dtype),
        grid=grid,
        in_specs=[
            pl.BlockSpec((tm_eff, K), lambda i: (i, 0)),
            pl.BlockSpec((K, Np), lambda i: (0, 0)),
            pl.BlockSpec((1, Np), lambda i: (0, 0)),
            pl.BlockSpec((1, Np), lambda i: (0, 0)),
        ],
        out_specs=pl.BlockSpec((tm_eff, Np), lambda i: (i, 0)),
        compiler_params=pltpu.CompilerParams(
            dimension_semantics=("parallel",)),
        cost_estimate=cost,
    )(x_bf, w_bf, s2, t2)

    if Mp != M or Np != Nc:
        out = out[:M, :Nc]
    return out


def conv_transpose2x2_bn_act(x_nhwc, w_iohw, bias, bn=None, *, act,
                             out_dtype=jnp.bfloat16):
    """ConvTranspose2d(Cin, Cout, kernel=2, stride=2) [+ eval BN2d] + act.

    w_iohw uses the PyTorch ConvTranspose2d layout (Cin, Cout, 2, 2).
    stride == kernel -> output 2x2 tiles never overlap, so the op is a single
    per-pixel GEMM (K=Cin, N=4*Cout) + depth-to-space reshape.
    """
    N, H, W, Cin = x_nhwc.shape
    Cin2, Cout, kh, kw = w_iohw.shape
    assert (Cin2, kh, kw) == (Cin, 2, 2)

    # GEMM columns ordered (i, j, co):  out[n, 2h+i, 2w+j, co].
    w_mat = jnp.transpose(w_iohw, (0, 2, 3, 1)).reshape(Cin, 4 * Cout)

    bias = bias.astype(jnp.float32)
    if bn is None:
        s_c = jnp.ones((Cout,), jnp.float32)
        t_c = bias
    else:
        gamma, beta, mean, var = bn
        s_c = gamma.astype(jnp.float32) * jax.lax.rsqrt(
            var.astype(jnp.float32) + _BN_EPS)
        t_c = (bias - mean.astype(jnp.float32)) * s_c + beta.astype(jnp.float32)
    scale = jnp.tile(s_c, 4)     # per-channel affine, constant over the 2x2 taps
    shift = jnp.tile(t_c, 4)

    y = fused_gemm_affine_act(x_nhwc.reshape(N * H * W, Cin), w_mat, scale,
                              shift, act=act, out_dtype=out_dtype)
    # depth-to-space: (N*H*W, (i,j,co)) -> (N, 2H, 2W, Cout)
    y = y.reshape(N, H, W, 2, 2, Cout)
    y = jnp.transpose(y, (0, 1, 3, 2, 4, 5)).reshape(N, 2 * H, 2 * W, Cout)
    return y


def init_params(key, dim):
    c4 = 4 * dim
    feat = 4 * 4 * c4
    ks = jax.random.split(key, 11)

    def normal(k, shape, scl):
        return scl * jax.random.normal(k, shape, jnp.float32)

    def bn(k, c):
        k1, k2, k3, k4 = jax.random.split(k, 4)
        return {
            "gamma": 1.0 + 0.1 * jax.random.normal(k1, (c,), jnp.float32),
            "beta": 0.1 * jax.random.normal(k2, (c,), jnp.float32),
            "mean": 0.1 * jax.random.normal(k3, (c,), jnp.float32),
            "var": 0.5 + jax.random.uniform(k4, (c,), jnp.float32),
        }

    return {
        # Linear(128 -> 4*4*4*DIM), PyTorch layout (out_features, in_features)
        "w_lin": normal(ks[0], (feat, 128), 1.0 / np.sqrt(128.0)),
        "b_lin": normal(ks[1], (feat,), 0.01),
        "bn0": bn(ks[2], feat),
        # ConvTranspose2d weights, PyTorch layout (Cin, Cout, 2, 2)
        "w1": normal(ks[3], (c4, 2 * dim, 2, 2), 1.0 / np.sqrt(4.0 * c4)),
        "b1": normal(ks[4], (2 * dim,), 0.01),
        "bn1": bn(ks[5], 2 * dim),
        "w2": normal(ks[6], (2 * dim, dim, 2, 2), 1.0 / np.sqrt(8.0 * dim)),
        "b2": normal(ks[7], (dim,), 0.01),
        "bn2": bn(ks[8], dim),
        "w3": normal(ks[9], (dim, 3, 2, 2), 1.0 / np.sqrt(4.0 * dim)),
        "b3": normal(ks[10], (3,), 0.01),
    }


def generator_forward(params, z, dim):
    """z: (N, 128) -> images (N, 3, 32, 32) matching the PyTorch Generator."""
    # TODO(synk): BatchNorm is folded in inference mode (running statistics);
    # training-mode batch statistics would need a cross-tile reduction pass.
    c4 = 4 * dim
    n = z.shape[0]

    # ---- preprocess: Linear + BN1d + ReLU ---------------------------------
    bn0 = params["bn0"]
    s0 = bn0["gamma"] * jax.lax.rsqrt(bn0["var"] + _BN_EPS)
    t0 = (params["b_lin"] - bn0["mean"]) * s0 + bn0["beta"]
    w_lin = params["w_lin"].T                       # (128, 4*4*4*DIM)
    # Permute output features from the PyTorch view(-1, 4*DIM, 4, 4) (c,h,w)
    # order to NHWC (h,w,c) so the GEMM result reshapes straight to NHWC —
    # no activation transpose before the first deconv.
    hh = jnp.arange(4)[:, None, None]
    ww = jnp.arange(4)[None, :, None]
    cc = jnp.arange(c4)[None, None, :]
    perm = (cc * 16 + hh * 4 + ww).reshape(-1)      # new (h,w,c) -> old (c,h,w)
    x = fused_gemm_affine_act(z, w_lin[:, perm], s0[perm], t0[perm],
                              act="relu", out_dtype=jnp.bfloat16)
    x = x.reshape(n, 4, 4, c4)                      # NHWC

    # ---- block1 / block2: ConvTranspose2d(k=2, s=2) + BN2d + ReLU ---------
    bn1, bn2 = params["bn1"], params["bn2"]
    x = conv_transpose2x2_bn_act(
        x, params["w1"], params["b1"],
        bn=(bn1["gamma"], bn1["beta"], bn1["mean"], bn1["var"]),
        act="relu", out_dtype=jnp.bfloat16)         # (N, 8, 8, 2*DIM)
    x = conv_transpose2x2_bn_act(
        x, params["w2"], params["b2"],
        bn=(bn2["gamma"], bn2["beta"], bn2["mean"], bn2["var"]),
        act="relu", out_dtype=jnp.bfloat16)         # (N, 16, 16, DIM)

    # ---- deconv_out + tanh (tanh fused in the kernel) ----------------------
    x = conv_transpose2x2_bn_act(
        x, params["w3"], params["b3"], bn=None,
        act="tanh", out_dtype=jnp.float32)          # (N, 32, 32, 3)

    # Match the PyTorch output layout: .view(-1, 3, 32, 32) (NCHW).
    return jnp.transpose(x, (0, 3, 1, 2))


def _reference_forward(params, z, dim):
    """Pure-jnp f32 reference (same eval-mode BatchNorm folding), NCHW out."""
    def bn_affine(p):
        s = p["gamma"] / jnp.sqrt(p["var"] + _BN_EPS)
        return s, p["beta"] - p["mean"] * s

    c4 = 4 * dim
    y = z @ params["w_lin"].T + params["b_lin"]
    s0, t0 = bn_affine(params["bn0"])
    y = jnp.maximum(y * s0 + t0, 0.0)
    x = y.reshape(-1, c4, 4, 4)                     # NCHW

    def conv_t(x, w, b):
        y = jnp.einsum("nchw,cdij->ndhiwj", x, w)
        n, d, h, _, w_, _ = y.shape
        return y.reshape(n, d, 2 * h, 2 * w_) + b[None, :, None, None]

    for wk, bk, bnk in (("w1", "b1", "bn1"), ("w2", "b2", "bn2")):
        x = conv_t(x, params[wk], params[bk])
        s, t = bn_affine(params[bnk])
        x = jnp.maximum(x * s[None, :, None, None] + t[None, :, None, None], 0.0)
    x = conv_t(x, params["w3"], params["b3"])
    return jnp.tanh(x)


if __name__ == "__main__":
    DIM = 32                 # small synthetic size (PyTorch default is 128)
    BATCH = 2
    key = jax.random.PRNGKey(0)
    pkey, zkey = jax.random.split(key)
    params = init_params(pkey, DIM)
    z = jax.random.normal(zkey, (BATCH, 128), jnp.float32)

    fwd = jax.jit(functools.partial(generator_forward, dim=DIM))
    out = jax.block_until_ready(fwd(params, z))
    assert out.shape == (BATCH, 3, 32, 32), out.shape
    assert out.dtype == jnp.float32

    ref = _reference_forward(params, z, DIM)
    np.testing.assert_allclose(np.asarray(out), np.asarray(ref), atol=0.1)
    print("KERNEL_OK")
</pallas_src>

<mosaic_0001>
module attributes {stable_mosaic.version = 11 : i64} {
  func.func @_gemm_affine_act_kernel(%arg0: i32, %arg1: memref<2x128xbf16, #tpu.memory_space<vmem>>, %arg2: memref<128x2048xbf16, #tpu.memory_space<vmem>>, %arg3: memref<1x2048xf32, #tpu.memory_space<vmem>>, %arg4: memref<1x2048xf32, #tpu.memory_space<vmem>>, %arg5: memref<2x2048xbf16, #tpu.memory_space<vmem>>) attributes {dimension_semantics = [#tpu.dimension_semantics<parallel>], iteration_bounds = array<i64: 1>, scalar_prefetch = 0 : i64, scratch_operands = 0 : i64, tpu.core_type = #tpu.core_type<tc>, window_params = [{transform_indices = @transform_0, window_bounds = array<i64: 2, 128>}, {pipeline_mode = #tpu.pipeline_mode<synchronous>, transform_indices = @transform_1, window_bounds = array<i64: 128, 2048>}, {pipeline_mode = #tpu.pipeline_mode<synchronous>, transform_indices = @transform_2, window_bounds = array<i64: 1, 2048>}, {pipeline_mode = #tpu.pipeline_mode<synchronous>, transform_indices = @transform_3, window_bounds = array<i64: 1, 2048>}, {transform_indices = @transform_4, window_bounds = array<i64: 2, 2048>}]} {
    %c0 = arith.constant 0 : index
    %c0_0 = arith.constant 0 : index
    %0 = vector.load %arg1[%c0, %c0_0] : memref<2x128xbf16, #tpu.memory_space<vmem>>, vector<2x128xbf16>
    %c0_1 = arith.constant 0 : index
    %c0_2 = arith.constant 0 : index
    %1 = vector.load %arg2[%c0_1, %c0_2] : memref<128x2048xbf16, #tpu.memory_space<vmem>>, vector<128x2048xbf16>
    %cst = arith.constant dense<0.000000e+00> : vector<2x2048xf32>
    %2 = tpu.matmul %0, %1, %cst {dimension_numbers = #tpu.dot_dimension_numbers<[1], [0], [0], [1], [0, 0, 1, 1], [], []>} : vector<2x128xbf16>, vector<128x2048xbf16>, vector<2x2048xf32> -> vector<2x2048xf32>
    %c0_3 = arith.constant 0 : index
    %c0_4 = arith.constant 0 : index
    %3 = vector.load %arg3[%c0_3, %c0_4] : memref<1x2048xf32, #tpu.memory_space<vmem>>, vector<1x2048xf32>
    %4 = vector.broadcast %3 : vector<1x2048xf32> to vector<2x2048xf32>
    %5 = arith.mulf %2, %4 : vector<2x2048xf32>
    %c0_5 = arith.constant 0 : index
    %c0_6 = arith.constant 0 : index
    %6 = vector.load %arg4[%c0_5, %c0_6] : memref<1x2048xf32, #tpu.memory_space<vmem>>, vector<1x2048xf32>
    %7 = vector.broadcast %6 : vector<1x2048xf32> to vector<2x2048xf32>
    %8 = arith.addf %5, %7 : vector<2x2048xf32>
    %cst_7 = arith.constant 0.000000e+00 : f32
    %9 = vector.broadcast %cst_7 : f32 to vector<2x2048xf32>
    %10 = arith.maximumf %8, %9 : vector<2x2048xf32>
    %11 = arith.truncf %10 : vector<2x2048xf32> to vector<2x2048xbf16>
    %c0_8 = arith.constant 0 : index
    %c0_9 = arith.constant 0 : index
    %12 = vector.load %arg5[%c0_8, %c0_9] : memref<2x2048xbf16, #tpu.memory_space<vmem>>, vector<2x2048xbf16>
    tpu.vector_store %arg5[%c0_8, %c0_9], %11 {strides = array<i32>} : memref<2x2048xbf16, #tpu.memory_space<vmem>>, vector<2x2048xbf16>,
    return
  }
  func.func @transform_0(%arg0: i32) -> (i32, i32) {
    %c0_i32 = arith.constant 0 : i32
    %c0_i32_0 = arith.constant 0 : i32
    return %arg0, %c0_i32 : i32, i32
  }
  func.func @transform_1(%arg0: i32) -> (i32, i32) {
    %c0_i32 = arith.constant 0 : i32
    %c0_i32_0 = arith.constant 0 : i32
    %c0_i32_1 = arith.constant 0 : i32
    return %c0_i32, %c0_i32_0 : i32, i32
  }
  func.func @transform_2(%arg0: i32) -> (i32, i32) {
    %c0_i32 = arith.constant 0 : i32
    %c0_i32_0 = arith.constant 0 : i32
    %c0_i32_1 = arith.constant 0 : i32
    return %c0_i32, %c0_i32_0 : i32, i32
  }
  func.func @transform_3(%arg0: i32) -> (i32, i32) {
    %c0_i32 = arith.constant 0 : i32
    %c0_i32_0 = arith.constant 0 : i32
    %c0_i32_1 = arith.constant 0 : i32
    return %c0_i32, %c0_i32_0 : i32, i32
  }
  func.func @transform_4(%arg0: i32) -> (i32, i32) {
    %c0_i32 = arith.constant 0 : i32
    %c0_i32_0 = arith.constant 0 : i32
    return %arg0, %c0_i32 : i32, i32
  }
}

module attributes {stable_mosaic.version = 11 : i64} {
  func.func @_gemm_affine_act_kernel(%arg0: i32, %arg1: memref<32x128xbf16, #tpu.memory_space<vmem>>, %arg2: memref<128x256xbf16, #tpu.memory_space<vmem>>, %arg3: memref<1x256xf32, #tpu.memory_space<vmem>>, %arg4: memref<1x256xf32, #tpu.memory_space<vmem>>, %arg5: memref<32x256xbf16, #tpu.memory_space<vmem>>) attributes {dimension_semantics = [#tpu.dimension_semantics<parallel>], iteration_bounds = array<i64: 1>, scalar_prefetch = 0 : i64, scratch_operands = 0 : i64, tpu.core_type = #tpu.core_type<tc>, window_params = [{transform_indices = @transform_0, window_bounds = array<i64: 32, 128>}, {pipeline_mode = #tpu.pipeline_mode<synchronous>, transform_indices = @transform_1, window_bounds = array<i64: 128, 256>}, {pipeline_mode = #tpu.pipeline_mode<synchronous>, transform_indices = @transform_2, window_bounds = array<i64: 1, 256>}, {pipeline_mode = #tpu.pipeline_mode<synchronous>, transform_indices = @transform_3, window_bounds = array<i64: 1, 256>}, {transform_indices = @transform_4, window_bounds = array<i64: 32, 256>}]} {
    %c0 = arith.constant 0 : index
    %c0_0 = arith.constant 0 : index
    %0 = vector.load %arg1[%c0, %c0_0] : memref<32x128xbf16, #tpu.memory_space<vmem>>, vector<32x128xbf16>
    %c0_1 = arith.constant 0 : index
    %c0_2 = arith.constant 0 : index
    %1 = vector.load %arg2[%c0_1, %c0_2] : memref<128x256xbf16, #tpu.memory_space<vmem>>, vector<128x256xbf16>
    %cst = arith.constant dense<0.000000e+00> : vector<32x256xf32>
    %2 = tpu.matmul %0, %1, %cst {dimension_numbers = #tpu.dot_dimension_numbers<[1], [0], [0], [1], [0, 0, 1, 1], [], []>} : vector<32x128xbf16>, vector<128x256xbf16>, vector<32x256xf32> -> vector<32x256xf32>
    %c0_3 = arith.constant 0 : index
    %c0_4 = arith.constant 0 : index
    %3 = vector.load %arg3[%c0_3, %c0_4] : memref<1x256xf32, #tpu.memory_space<vmem>>, vector<1x256xf32>
    %4 = vector.broadcast %3 : vector<1x256xf32> to vector<32x256xf32>
    %5 = arith.mulf %2, %4 : vector<32x256xf32>
    %c0_5 = arith.constant 0 : index
    %c0_6 = arith.constant 0 : index
    %6 = vector.load %arg4[%c0_5, %c0_6] : memref<1x256xf32, #tpu.memory_space<vmem>>, vector<1x256xf32>
    %7 = vector.broadcast %6 : vector<1x256xf32> to vector<32x256xf32>
    %8 = arith.addf %5, %7 : vector<32x256xf32>
    %cst_7 = arith.constant 0.000000e+00 : f32
    %9 = vector.broadcast %cst_7 : f32 to vector<32x256xf32>
    %10 = arith.maximumf %8, %9 : vector<32x256xf32>
    %11 = arith.truncf %10 : vector<32x256xf32> to vector<32x256xbf16>
    %c0_8 = arith.constant 0 : index
    %c0_9 = arith.constant 0 : index
    %12 = vector.load %arg5[%c0_8, %c0_9] : memref<32x256xbf16, #tpu.memory_space<vmem>>, vector<32x256xbf16>
    tpu.vector_store %arg5[%c0_8, %c0_9], %11 {strides = array<i32>} : memref<32x256xbf16, #tpu.memory_space<vmem>>, vector<32x256xbf16>,
    return
  }
  func.func @transform_0(%arg0: i32) -> (i32, i32) {
    %c0_i32 = arith.constant 0 : i32
    %c0_i32_0 = arith.constant 0 : i32
    return %arg0, %c0_i32 : i32, i32
  }
  func.func @transform_1(%arg0: i32) -> (i32, i32) {
    %c0_i32 = arith.constant 0 : i32
    %c0_i32_0 = arith.constant 0 : i32
    %c0_i32_1 = arith.constant 0 : i32
    return %c0_i32, %c0_i32_0 : i32, i32
  }
  func.func @transform_2(%arg0: i32) -> (i32, i32) {
    %c0_i32 = arith.constant 0 : i32
    %c0_i32_0 = arith.constant 0 : i32
    %c0_i32_1 = arith.constant 0 : i32
    return %c0_i32, %c0_i32_0 : i32, i32
  }
  func.func @transform_3(%arg0: i32) -> (i32, i32) {
    %c0_i32 = arith.constant 0 : i32
    %c0_i32_0 = arith.constant 0 : i32
    %c0_i32_1 = arith.constant 0 : i32
    return %c0_i32, %c0_i32_0 : i32, i32
  }
  func.func @transform_4(%arg0: i32) -> (i32, i32) {
    %c0_i32 = arith.constant 0 : i32
    %c0_i32_0 = arith.constant 0 : i32
    return %arg0, %c0_i32 : i32, i32
  }
}

module attributes {stable_mosaic.version = 11 : i64} {
  func.func @_gemm_affine_act_kernel(%arg0: i32, %arg1: memref<128x64xbf16, #tpu.memory_space<vmem>>, %arg2: memref<64x128xbf16, #tpu.memory_space<vmem>>, %arg3: memref<1x128xf32, #tpu.memory_space<vmem>>, %arg4: memref<1x128xf32, #tpu.memory_space<vmem>>, %arg5: memref<128x128xbf16, #tpu.memory_space<vmem>>) attributes {dimension_semantics = [#tpu.dimension_semantics<parallel>], iteration_bounds = array<i64: 1>, scalar_prefetch = 0 : i64, scratch_operands = 0 : i64, tpu.core_type = #tpu.core_type<tc>, window_params = [{transform_indices = @transform_0, window_bounds = array<i64: 128, 64>}, {pipeline_mode = #tpu.pipeline_mode<synchronous>, transform_indices = @transform_1, window_bounds = array<i64: 64, 128>}, {pipeline_mode = #tpu.pipeline_mode<synchronous>, transform_indices = @transform_2, window_bounds = array<i64: 1, 128>}, {pipeline_mode = #tpu.pipeline_mode<synchronous>, transform_indices = @transform_3, window_bounds = array<i64: 1, 128>}, {transform_indices = @transform_4, window_bounds = array<i64: 128, 128>}]} {
    %c0 = arith.constant 0 : index
    %c0_0 = arith.constant 0 : index
    %0 = vector.load %arg1[%c0, %c0_0] : memref<128x64xbf16, #tpu.memory_space<vmem>>, vector<128x64xbf16>
    %c0_1 = arith.constant 0 : index
    %c0_2 = arith.constant 0 : index
    %1 = vector.load %arg2[%c0_1, %c0_2] : memref<64x128xbf16, #tpu.memory_space<vmem>>, vector<64x128xbf16>
    %cst = arith.constant dense<0.000000e+00> : vector<128x128xf32>
    %2 = tpu.matmul %0, %1, %cst {dimension_numbers = #tpu.dot_dimension_numbers<[1], [0], [0], [1], [0, 0, 1, 1], [], []>} : vector<128x64xbf16>, vector<64x128xbf16>, vector<128x128xf32> -> vector<128x128xf32>
    %c0_3 = arith.constant 0 : index
    %c0_4 = arith.constant 0 : index
    %3 = vector.load %arg3[%c0_3, %c0_4] : memref<1x128xf32, #tpu.memory_space<vmem>>, vector<1x128xf32>
    %4 = vector.broadcast %3 : vector<1x128xf32> to vector<128x128xf32>
    %5 = arith.mulf %2, %4 : vector<128x128xf32>
    %c0_5 = arith.constant 0 : index
    %c0_6 = arith.constant 0 : index
    %6 = vector.load %arg4[%c0_5, %c0_6] : memref<1x128xf32, #tpu.memory_space<vmem>>, vector<1x128xf32>
    %7 = vector.broadcast %6 : vector<1x128xf32> to vector<128x128xf32>
    %8 = arith.addf %5, %7 : vector<128x128xf32>
    %cst_7 = arith.constant 0.000000e+00 : f32
    %9 = vector.broadcast %cst_7 : f32 to vector<128x128xf32>
    %10 = arith.maximumf %8, %9 : vector<128x128xf32>
    %11 = arith.truncf %10 : vector<128x128xf32> to vector<128x128xbf16>
    %c0_8 = arith.constant 0 : index
    %c0_9 = arith.constant 0 : index
    %12 = vector.load %arg5[%c0_8, %c0_9] : memref<128x128xbf16, #tpu.memory_space<vmem>>, vector<128x128xbf16>
    tpu.vector_store %arg5[%c0_8, %c0_9], %11 {strides = array<i32>} : memref<128x128xbf16, #tpu.memory_space<vmem>>, vector<128x128xbf16>,
    return
  }
  func.func @transform_0(%arg0: i32) -> (i32, i32) {
    %c0_i32 = arith.constant 0 : i32
    %c0_i32_0 = arith.constant 0 : i32
    return %arg0, %c0_i32 : i32, i32
  }
  func.func @transform_1(%arg0: i32) -> (i32, i32) {
    %c0_i32 = arith.constant 0 : i32
    %c0_i32_0 = arith.constant 0 : i32
    %c0_i32_1 = arith.constant 0 : i32
    return %c0_i32, %c0_i32_0 : i32, i32
  }
  func.func @transform_2(%arg0: i32) -> (i32, i32) {
    %c0_i32 = arith.constant 0 : i32
    %c0_i32_0 = arith.constant 0 : i32
    %c0_i32_1 = arith.constant 0 : i32
    return %c0_i32, %c0_i32_0 : i32, i32
  }
  func.func @transform_3(%arg0: i32) -> (i32, i32) {
    %c0_i32 = arith.constant 0 : i32
    %c0_i32_0 = arith.constant 0 : i32
    %c0_i32_1 = arith.constant 0 : i32
    return %c0_i32, %c0_i32_0 : i32, i32
  }
  func.func @transform_4(%arg0: i32) -> (i32, i32) {
    %c0_i32 = arith.constant 0 : i32
    %c0_i32_0 = arith.constant 0 : i32
    return %arg0, %c0_i32 : i32, i32
  }
}

module attributes {stable_mosaic.version = 11 : i64} {
  func.func @_gemm_affine_act_kernel(%arg0: i32, %arg1: memref<256x32xbf16, #tpu.memory_space<vmem>>, %arg2: memref<32x128xbf16, #tpu.memory_space<vmem>>, %arg3: memref<1x128xf32, #tpu.memory_space<vmem>>, %arg4: memref<1x128xf32, #tpu.memory_space<vmem>>, %arg5: memref<256x128xf32, #tpu.memory_space<vmem>>) attributes {dimension_semantics = [#tpu.dimension_semantics<parallel>], iteration_bounds = array<i64: 2>, scalar_prefetch = 0 : i64, scratch_operands = 0 : i64, tpu.core_type = #tpu.core_type<tc>, window_params = [{transform_indices = @transform_0, window_bounds = array<i64: 256, 32>}, {pipeline_mode = #tpu.pipeline_mode<synchronous>, transform_indices = @transform_1, window_bounds = array<i64: 32, 128>}, {pipeline_mode = #tpu.pipeline_mode<synchronous>, transform_indices = @transform_2, window_bounds = array<i64: 1, 128>}, {pipeline_mode = #tpu.pipeline_mode<synchronous>, transform_indices = @transform_3, window_bounds = array<i64: 1, 128>}, {transform_indices = @transform_4, window_bounds = array<i64: 256, 128>}]} {
    %c0 = arith.constant 0 : index
    %c0_0 = arith.constant 0 : index
    %0 = vector.load %arg1[%c0, %c0_0] : memref<256x32xbf16, #tpu.memory_space<vmem>>, vector<256x32xbf16>
    %c0_1 = arith.constant 0 : index
    %c0_2 = arith.constant 0 : index
    %1 = vector.load %arg2[%c0_1, %c0_2] : memref<32x128xbf16, #tpu.memory_space<vmem>>, vector<32x128xbf16>
    %cst = arith.constant dense<0.000000e+00> : vector<256x128xf32>
    %2 = tpu.matmul %0, %1, %cst {dimension_numbers = #tpu.dot_dimension_numbers<[1], [0], [0], [1], [0, 0, 1, 1], [], []>} : vector<256x32xbf16>, vector<32x128xbf16>, vector<256x128xf32> -> vector<256x128xf32>
    %c0_3 = arith.constant 0 : index
    %c0_4 = arith.constant 0 : index
    %3 = vector.load %arg3[%c0_3, %c0_4] : memref<1x128xf32, #tpu.memory_space<vmem>>, vector<1x128xf32>
    %4 = vector.broadcast %3 : vector<1x128xf32> to vector<256x128xf32>
    %5 = arith.mulf %2, %4 : vector<256x128xf32>
    %c0_5 = arith.constant 0 : index
    %c0_6 = arith.constant 0 : index
    %6 = vector.load %arg4[%c0_5, %c0_6] : memref<1x128xf32, #tpu.memory_space<vmem>>, vector<1x128xf32>
    %7 = vector.broadcast %6 : vector<1x128xf32> to vector<256x128xf32>
    %8 = arith.addf %5, %7 : vector<256x128xf32>
    %9 = math.tanh %8 : vector<256x128xf32>
    %c0_7 = arith.constant 0 : index
    %c0_8 = arith.constant 0 : index
    %10 = vector.load %arg5[%c0_7, %c0_8] : memref<256x128xf32, #tpu.memory_space<vmem>>, vector<256x128xf32>
    tpu.vector_store %arg5[%c0_7, %c0_8], %9 {strides = array<i32>} : memref<256x128xf32, #tpu.memory_space<vmem>>, vector<256x128xf32>,
    return
  }
  func.func @transform_0(%arg0: i32) -> (i32, i32) {
    %c0_i32 = arith.constant 0 : i32
    %c0_i32_0 = arith.constant 0 : i32
    return %arg0, %c0_i32 : i32, i32
  }
  func.func @transform_1(%arg0: i32) -> (i32, i32) {
    %c0_i32 = arith.constant 0 : i32
    %c0_i32_0 = arith.constant 0 : i32
    %c0_i32_1 = arith.constant 0 : i32
    return %c0_i32, %c0_i32_0 : i32, i32
  }
  func.func @transform_2(%arg0: i32) -> (i32, i32) {
    %c0_i32 = arith.constant 0 : i32
    %c0_i32_0 = arith.constant 0 : i32
    %c0_i32_1 = arith.constant 0 : i32
    return %c0_i32, %c0_i32_0 : i32, i32
  }
  func.func @transform_3(%arg0: i32) -> (i32, i32) {
    %c0_i32 = arith.constant 0 : i32
    %c0_i32_0 = arith.constant 0 : i32
    %c0_i32_1 = arith.constant 0 : i32
    return %c0_i32, %c0_i32_0 : i32, i32
  }
  func.func @transform_4(%arg0: i32) -> (i32, i32) {
    %c0_i32 = arith.constant 0 : i32
    %c0_i32_0 = arith.constant 0 : i32
    return %arg0, %c0_i32 : i32, i32
  }
}

</mosaic_0001>

<llo_original>
// kernel: tile.42
$region0: #{tile.42}
  #allocation0 [shape = 's32[1]{0}', space=sflag, size = 0x4, scoped, tag = 'scoped memory for tile.42']
  %s0 = inlined_call_operand.vmem [shape: f32[32], index: 0, kind: input, shape index: {}]
  %s1 = inlined_call_operand.vmem [shape: f32[4,32], index: 1, kind: output, shape index: {}]
  // Predicated region
  $region2: #{tile.42} parent=0 // pred_check
    _
  $region3: #{tile.42} parent=0 // pred_check_branch
    %3 = sbr.rel (0) target = $region5
  $region4: #{tile.42} parent=0 // pred_region
    _
  $region5: #{tile.42} parent=0 // pred_fallthru
    _
  %v4 = vld [vmem:[%s0] ss:$0 sm:$0xff]
  %5 = vst [vmem:[%s1] sm:$0xf] %v4

// kernel: tile.32
$region0: #{tile.32}
  #allocation0 [shape = 's32[1]{0}', space=sflag, size = 0x4, scoped, tag = 'scoped memory for tile.32']
  %s0 = inlined_call_operand.vmem [shape: f32[64], index: 0, kind: input, shape index: {}]
  %s1 = inlined_call_operand.vmem [shape: f32[4,64], index: 1, kind: output, shape index: {}]
  // Predicated region
  $region2: #{tile.32} parent=0 // pred_check
    _
  $region3: #{tile.32} parent=0 // pred_check_branch
    %3 = sbr.rel (0) target = $region5
  $region4: #{tile.32} parent=0 // pred_region
    _
  $region5: #{tile.32} parent=0 // pred_fallthru
    _
  %v4 = vld [vmem:[%s0] ss:$0 sm:$0xff]
  %5 = vst [vmem:[%s1] sm:$0xf] %v4

// kernel: tile.34
$region0: #{tile.34}
  %s0 = inlined_call_operand.vmem [shape: f32[4,64], index: 0, kind: input, shape index: {}]
  %s1 = inlined_call_operand.vmem [shape: f32[1,256], index: 1, kind: output, shape index: {}]
  $region1: #{tile.34} parent=0
    #allocation0 [shape = 'u8[8192]{0}', space=vmem, size = 0x2000, scoped, tag = 'scoped mem for output reshape']
    #allocation1 [shape = 'u8[4096]{0}', space=vmem, size = 0x1000, scoped, tag = 'scoped mem for input reshape']
    %s3 = ssub.s32 16, 1
    %v4 = vld [vmem:[%s0] sm:%s3]
    %5 = vst [vmem:[#allocation1] sm:%s3] %v4
    %s6 = smov 3
    %v7 = vld [vmem:[#allocation1] ss:$2 sm:%s6]
    %vm8 = vcmask 523264
    %9 = vst.msk [vmem:[#allocation0] ss:$8 sm:$0x3] %vm8, %v7
    %s10 = scalar_lea.vmem [#allocation1], 1
    %s11 = smov 3
    %v12 = vld [vmem:[%s10] ss:$2 sm:%s11]
    %13 = vrot.lane.b32.xlu0 %v12, 64
    %v14 = vpop.permute.xlu0 %13
    %vm15 = vcmask 1048064
    %16 = vst.msk [vmem:[#allocation0] ss:$8 sm:$0x3] %vm15, %v14
    %s18 = ssub.s32 2, 1
    %v19 = vld [vmem:[#allocation0] sm:%s18]
    %s21 = ssub.s32 2, 1
    %22 = vst [vmem:[%s1] sm:%s21] %v19
    %s23 = scalar_lea.vmem [#allocation0], 8
    %v24 = vld [vmem:[%s23] sm:%s18]
    %s26 = ssub.s32 2, 1
    %s27 = scalar_lea.vmem %s1, 1
    %28 = vst [vmem:[%s27] sm:%s26] %v24

// kernel: tile.44
$region0: #{tile.44}
  %s0 = inlined_call_operand.vmem [shape: f32[4,32], index: 0, kind: input, shape index: {}]
  %s1 = inlined_call_operand.vmem [shape: f32[1,128], index: 1, kind: output, shape index: {}]
  $region1: #{tile.44} parent=0
    #allocation0 [shape = 'u8[4096]{0}', space=vmem, size = 0x1000, scoped, tag = 'scoped mem for output reshape']
    #allocation1 [shape = 'u8[4096]{0}', space=vmem, size = 0x1000, scoped, tag = 'scoped mem for input reshape']
    %s3 = ssub.s32 16, 1
    %v4 = vld [vmem:[%s0] sm:%s3]
    %5 = vst [vmem:[#allocation1] sm:%s3] %v4
    %v6 = vld [vmem:[#allocation1] sm:$0x1]
    %vm7 = vcmask 261120
    %8 = vst.msk [vmem:[#allocation0] sm:$0x1] %vm7, %v6
    %s9 = scalar_lea.vmem [#allocation1], 3
    %v10 = vld [vmem:[%s9] sm:$0x1]
    %11 = vrot.lane.b32.xlu0 %v10, 96
    %v12 = vpop.permute.xlu0 %11
    %vm13 = vcmask 1048320
    %14 = vst.msk [vmem:[#allocation0] sm:$0x1] %vm13, %v12
    %s15 = scalar_lea.vmem [#allocation1], 2
    %v16 = vld [vmem:[%s15] sm:$0x1]
    %17 = vrot.lane.b32.xlu0 %v16, 64
    %v18 = vpop.permute.xlu0 %17
    %vm19 = vcmask 785920
    %20 = vst.msk [vmem:[#allocation0] sm:$0x1] %vm19, %v18
    %s21 = scalar_lea.vmem [#allocation1], 1
    %v22 = vld [vmem:[%s21] sm:$0x1]
    %23 = vrot.lane.b32.xlu0 %v22, 32
    %v24 = vpop.permute.xlu0 %23
    %vm25 = vcmask 523520
    %26 = vst.msk [vmem:[#allocation0] sm:$0x1] %vm25, %v24
    %s28 = ssub.s32 2, 1
    %v29 = vld [vmem:[#allocation0] sm:%s28]
    %s31 = ssub.s32 2, 1
    %32 = vst [vmem:[%s1] sm:%s31] %v29

// kernel: tile.48
$region0: #{tile.48}
  #allocation2 [shape = 's32[1]{0}', space=sflag, size = 0x4, scoped, tag = 'scoped memory for tile.48']
  %s0 = inlined_call_operand.hbm [shape: f32[3], index: 0, kind: input, shape index: {}]
  %s1 = inlined_call_operand.vmem [shape: f32[4,3], index: 1, kind: output, shape index: {}]
  $region1: #{tile.48} parent=0
    #allocation0 [shape = 'u8[512]{0}', space=vmem, size = 0x400, scoped, tag = 'operand span for operand 0']
    #allocation1 [shape = 's32[1]{0}', space=sflag, size = 0x4, scoped, tag = 'scoped memory for tile.48']
    %2 = vsyncpa [#allocation1], 0
    // Predicated region
    $region2: #{tile.48} parent=1 // pred_check
      _
    $region3: #{tile.48} parent=1 // pred_check_branch
      %4 = sbr.rel (0) target = $region5
    $region4: #{tile.48} parent=1 // pred_region
      %6 = vsyncadd [#allocation1], 0
      %s8 = sshll.u32 %s0, 4
      %s9 = int_to_ptr.hbm [resolvable:$true] %s8
      %s10 = sshll.u32 [#allocation0], 4
      %s11 = int_to_ptr.vmem [resolvable:$true] %s10
      %13 = dma.hbm_to_vmem [thread:$0]  %s9, 16, %s11, [#allocation1]
    $region5: #{tile.48} parent=1 // pred_fallthru
      _
    // Predicated region
    $region6: #{tile.48} parent=1 // pred_check
      _
    $region7: #{tile.48} parent=1 // pred_check_branch
      %15 = sbr.rel (0) target = $region9
    $region8: #{tile.48} parent=1 // pred_region
      %17 = dma.done [#allocation1], 16
    $region9: #{tile.48} parent=1 // pred_fallthru
      _
    %v18 = vld [vmem:[#allocation0] ss:$0 sm:$0xff]
    %19 = vst [vmem:[%s1] sm:$0xf] %v18
    %20 = vsyncpa [#allocation1], 1

// kernel: tile.49
$region0: #{tile.49}
  %s0 = inlined_call_operand.vmem [shape: f32[4,3], index: 0, kind: input, shape index: {}]
  %s1 = inlined_call_operand.vmem [shape: f32[12], index: 1, kind: output, shape index: {}]
  $region1: #{tile.49} parent=0
    #allocation0 [shape = 'u8[4096]{0}', space=vmem, size = 0x1000, scoped, tag = 'scoped mem for output reshape']
    #allocation1 [shape = 'u8[4096]{0}', space=vmem, size = 0x1000, scoped, tag = 'scoped mem for input reshape']
    %s3 = ssub.s32 16, 1
    %v4 = vld [vmem:[%s0] sm:%s3]
    %5 = vst [vmem:[#allocation1] sm:%s3] %v4
    %v6 = vld [vmem:[#allocation1] sm:$0x1]
    %vm7 = vcmask 23552
    %8 = vst.msk [vmem:[#allocation0] sm:$0x1] %vm7, %v6
    %s9 = scalar_lea.vmem [#allocation1], 3
    %v10 = vld [vmem:[%s9] sm:$0x1]
    %11 = vrot.lane.b32.xlu0 %v10, 9
    %v12 = vpop.permute.xlu0 %11
    %vm13 = vcmask 97352
    %14 = vst.msk [vmem:[#allocation0] sm:$0x1] %vm13, %v12
    %s15 = scalar_lea.vmem [#allocation1], 2
    %v16 = vld [vmem:[%s15] sm:$0x1]
    %17 = vrot.lane.b32.xlu0 %v16, 6
    %v18 = vpop.permute.xlu0 %17
    %vm19 = vcmask 72752
    %20 = vst.msk [vmem:[#allocation0] sm:$0x1] %vm19, %v18
    %s21 = scalar_lea.vmem [#allocation1], 1
    %v22 = vld [vmem:[%s21] sm:$0x1]
    %23 = vrot.lane.b32.xlu0 %v22, 3
    %v24 = vpop.permute.xlu0 %23
    %vm25 = vcmask 48152
    %26 = vst.msk [vmem:[#allocation0] sm:$0x1] %vm25, %v24
    %s28 = ssub.s32 2, 1
    %v29 = vld [vmem:[#allocation0] sm:%s28]
    %s31 = ssub.s32 2, 1
    %32 = vst [vmem:[%s1] sm:%s31] %v29

// kernel: generator_forward.5
$region0: #{generator_forward.5}
  #allocation0 [shape = 'u32[]', space=smem, size = 0x4, offset = 0x4, fixed_abs, tag = 'smem constant byte address 0x4 - core index']
  #allocation1 [shape = 'u32[72,128]{1,0:T(1,128)}', space=vmem, size = 0x9000, scoped, tag = 'internal scratch']
  %s0 = inlined_call_operand.vmem [shape: bf16[32,128], index: 0, kind: input, shape index: {}]
  %s1 = inlined_call_operand.vmem [shape: bf16[128,256], index: 1, kind: input, shape index: {}]
  %s2 = inlined_call_operand.vmem [shape: f32[1,256], index: 2, kind: input, shape index: {}]
  %s3 = inlined_call_operand.vmem [shape: f32[1,256], index: 3, kind: input, shape index: {}]
  %s4 = inlined_call_operand.vmem [shape: bf16[32,256], index: 4, kind: output, shape index: {}]
  %s5 = sld [smem:[#allocation0]]
  $region26: #{generator_forward.5} parent=0
    _
  %s7 = ssub.s32 1, %s5
  %s8 = scalar_select 0, %s7, %s5
  // Predicated region
  $region2: #{generator_forward.5} parent=0 // pred_check
    _
  $region3: #{generator_forward.5} parent=0 // pred_check_branch
    %10 = sbr.rel (0) target = $region5
  $region4: #{generator_forward.5} parent=0 // pred_region
    _
  $region5: #{generator_forward.5} parent=0 // pred_fallthru
    _
  // Predicated region
  $region6: #{generator_forward.5} parent=0 // pred_check
    _
  $region7: #{generator_forward.5} parent=0 // pred_check_branch
    %12 = sbr.rel (0) target = $region9
  $region8: #{generator_forward.5} parent=0 // pred_region
    _
  $region9: #{generator_forward.5} parent=0 // pred_fallthru
    _
  // Predicated region
  $region10: #{generator_forward.5} parent=0 // pred_check
    _
  $region11: #{generator_forward.5} parent=0 // pred_check_branch
    %14 = sbr.rel (0) target = $region13
  $region12: #{generator_forward.5} parent=0 // pred_region
    _
  $region13: #{generator_forward.5} parent=0 // pred_fallthru
    _
  // Predicated region
  $region14: #{generator_forward.5} parent=0 // pred_check
    _
  $region15: #{generator_forward.5} parent=0 // pred_check_branch
    %16 = sbr.rel (0) target = $region17
  $region16: #{generator_forward.5} parent=0 // pred_region
    _
  $region17: #{generator_forward.5} parent=0 // pred_fallthru
    _
  %v17 = vld [vmem:[%s0] sm:$0xf]
  %v18 = vld [vmem:[%s0 + $0x4] sm:$0xf]
  %v19 = vld [vmem:[%s0 + $0x8] sm:$0xf]
  %v20 = vld [vmem:[%s0 + $0xc] sm:$0xf]
  %v21 = vld [vmem:[%s1] sm:$0xff]
  %v22 = vld [vmem:[%s1 + $0x8] sm:$0xff]
  %v23 = vld [vmem:[%s1 + $0x10] sm:$0xff]
  %v24 = vld [vmem:[%s1 + $0x18] sm:$0xff]
  %v25 = vld [vmem:[%s1 + $0x20] sm:$0xff]
  %v26 = vld [vmem:[%s1 + $0x28] sm:$0xff]
  %v27 = vld [vmem:[%s1 + $0x30] sm:$0xff]
  %v28 = vld [vmem:[%s1 + $0x38] sm:$0xff]
  %v29 = vld [vmem:[%s1 + $0x40] sm:$0xff]
  %v30 = vld [vmem:[%s1 + $0x48] sm:$0xff]
  %v31 = vld [vmem:[%s1 + $0x50] sm:$0xff]
  %v32 = vld [vmem:[%s1 + $0x58] sm:$0xff]
  %v33 = vld [vmem:[%s1 + $0x60] sm:$0xff]
  %v34 = vld [vmem:[%s1 + $0x68] sm:$0xff]
  %v35 = vld [vmem:[%s1 + $0x70] sm:$0xff]
  %v36 = vld [vmem:[%s1 + $0x78] sm:$0xff]
  %v41 = vunpack.c.l.b16 %v17
  %v42 = vunpack.c.l.b16 %v18
  %v43 = vunpack.c.l.b16 %v19
  %v44 = vunpack.c.l.b16 %v20
  %v45 = vpack.c.b16 %v42, %v41
  %v46 = vpack.c.b16 %v44, %v43
  %v65 = vunpack.c.l.b16 %v21
  %v66 = vunpack.c.h.b16 %v21
  %v67 = vunpack.c.l.b16 %v22
  %v68 = vunpack.c.h.b16 %v22
  %v69 = vunpack.c.l.b16 %v23
  %v70 = vunpack.c.h.b16 %v23
  %v71 = vunpack.c.l.b16 %v24
  %v72 = vunpack.c.h.b16 %v24
  %v73 = vunpack.c.l.b16 %v25
  %v74 = vunpack.c.h.b16 %v25
  %v75 = vunpack.c.l.b16 %v26
  %v76 = vunpack.c.h.b16 %v26
  %v77 = vunpack.c.l.b16 %v27
  %v78 = vunpack.c.h.b16 %v27
  %v79 = vunpack.c.l.b16 %v28
  %v80 = vunpack.c.h.b16 %v28
  %v81 = vunpack.c.l.b16 %v29
  %v82 = vunpack.c.h.b16 %v29
  %v83 = vunpack.c.l.b16 %v30
  %v84 = vunpack.c.h.b16 %v30
  %v85 = vunpack.c.l.b16 %v31
  %v86 = vunpack.c.h.b16 %v31
  %v87 = vunpack.c.l.b16 %v32
  %v88 = vunpack.c.h.b16 %v32
  %v89 = vunpack.c.l.b16 %v33
  %v90 = vunpack.c.h.b16 %v33
  %v91 = vunpack.c.l.b16 %v34
  %v92 = vunpack.c.h.b16 %v34
  %v93 = vunpack.c.l.b16 %v35
  %v94 = vunpack.c.h.b16 %v35
  %v95 = vunpack.c.l.b16 %v36
  %v96 = vunpack.c.h.b16 %v36
  %v97 = vpack.c.b16 %v67, %v65
  %v98 = vpack.c.b16 %v68, %v66
  %v99 = vpack.c.b16 %v71, %v69
  %v100 = vpack.c.b16 %v72, %v70
  %v101 = vpack.c.b16 %v75, %v73
  %v102 = vpack.c.b16 %v76, %v74
  %v103 = vpack.c.b16 %v79, %v77
  %v104 = vpack.c.b16 %v80, %v78
  %v105 = vpack.c.b16 %v83, %v81
  %v106 = vpack.c.b16 %v84, %v82
  %v107 = vpack.c.b16 %v87, %v85
  %v108 = vpack.c.b16 %v88, %v86
  %v109 = vpack.c.b16 %v91, %v89
  %v110 = vpack.c.b16 %v92, %v90
  %v111 = vpack.c.b16 %v95, %v93
  %v112 = vpack.c.b16 %v96, %v94
  %129 = vmatpush.bf16.msra.mxu0 %v111
  %130 = vmatpush.bf16.msra.mxu0 %v109
  %131 = vmatpush.bf16.msra.mxu0 %v107
  %132 = vmatpush.bf16.msra.mxu0 %v105
  %133 = vmatpush.bf16.msra.mxu0 %v103
  %134 = vmatpush.bf16.msra.mxu0 %v101
  %135 = vmatpush.bf16.msra.mxu0 %v99
  %136 = vmatpush.bf16.msra.mxu0 %v97
  %137 = vmatmul.bf16.gmra.mxu0 %v45
  %v138 = vpop.f32.mrf.mxu0
  %v139 = vadd.f32 0.0, %v138
  %v140 = vpop.f32.mrf.mxu0
  %v141 = vadd.f32 0.0, %v140
  %142 = vmatmul.bf16.gmra.mxu0 %v46
  %v143 = vpop.f32.mrf.mxu0
  %v144 = vadd.f32 0.0, %v143
  %v145 = vpop.f32.mrf.mxu0
  %v146 = vadd.f32 0.0, %v145
  %147 = vdwg.mxu0
  %148 = vmatpush.bf16.msra.mxu0 %v112
  %149 = vmatpush.bf16.msra.mxu0 %v110
  %150 = vmatpush.bf16.msra.mxu0 %v108
  %151 = vmatpush.bf16.msra.mxu0 %v106
  %152 = vmatpush.bf16.msra.mxu0 %v104
  %153 = vmatpush.bf16.msra.mxu0 %v102
  %154 = vmatpush.bf16.msra.mxu0 %v100
  %155 = vmatpush.bf16.msra.mxu0 %v98
  %156 = vmatmul.bf16.gmra.mxu0 %v45
  %v157 = vpop.f32.mrf.mxu0
  %v158 = vadd.f32 0.0, %v157
  %v159 = vpop.f32.mrf.mxu0
  %v160 = vadd.f32 0.0, %v159
  %161 = vmatmul.bf16.gmra.mxu0 %v46
  %v162 = vpop.f32.mrf.mxu0
  %v163 = vadd.f32 0.0, %v162
  %v164 = vpop.f32.mrf.mxu0
  %v165 = vadd.f32 0.0, %v164
  %166 = vdwg.mxu0
  %v167 = vld [vmem:[%s2] sm:$0x3]
  %v169 = vperm.slane %v167, 0
  %v170 = vperm.slane %v167, 1
  %v173 = vmul.f32 %v139, %v169
  %v174 = vmul.f32 %v158, %v170
  %v175 = vmul.f32 %v141, %v169
  %v176 = vmul.f32 %v160, %v170
  %v177 = vmul.f32 %v144, %v169
  %v178 = vmul.f32 %v163, %v170
  %v179 = vmul.f32 %v146, %v169
  %v180 = vmul.f32 %v165, %v170
  %v181 = vld [vmem:[%s3] sm:$0x3]
  %v183 = vperm.slane %v181, 0
  %v184 = vperm.slane %v181, 1
  %v187 = vadd.f32 %v173, %v183
  %v188 = vadd.f32 %v174, %v184
  %v189 = vadd.f32 %v175, %v183
  %v190 = vadd.f32 %v176, %v184
  %v191 = vadd.f32 %v177, %v183
  %v192 = vadd.f32 %v178, %v184
  %v193 = vadd.f32 %v179, %v183
  %v194 = vadd.f32 %v180, %v184
  %v195 = vmax.f32 %v187, 0.0
  %v196 = vmax.f32 %v188, 0.0
  %v197 = vmax.f32 %v189, 0.0
  %v198 = vmax.f32 %v190, 0.0
  %v199 = vmax.f32 %v191, 0.0
  %v200 = vmax.f32 %v192, 0.0
  %v201 = vmax.f32 %v193, 0.0
  %v202 = vmax.f32 %v194, 0.0
  %v203 = vpack.c.bf16 %v196, %v195
  %v204 = vpack.c.bf16 %v198, %v197
  %v205 = vpack.c.bf16 %v200, %v199
  %v206 = vpack.c.bf16 %v202, %v201
  %207 = vst [vmem:[%s4] sm:$0xff] %v203
  %208 = vst [vmem:[%s4 + $0x8] sm:$0xff] %v204
  %209 = vst [vmem:[%s4 + $0x10] sm:$0xff] %v205
  %210 = vst [vmem:[%s4 + $0x18] sm:$0xff] %v206
  // Predicated region
  $region18: #{generator_forward.5} parent=0 // pred_check
    _
  $region19: #{generator_forward.5} parent=0 // pred_check_branch
    %212 = sbr.rel (0) target = $region21
  $region20: #{generator_forward.5} parent=0 // pred_region
    _
  $region21: #{generator_forward.5} parent=0 // pred_fallthru
    _
  // Predicated region
  $region22: #{generator_forward.5} parent=0 // pred_check
    _
  $region23: #{generator_forward.5} parent=0 // pred_check_branch
    %214 = sbr.rel (0) target = $region25
  $region24: #{generator_forward.5} parent=0 // pred_region
    _
  $region25: #{generator_forward.5} parent=0 // pred_fallthru
    _

// kernel: generator_forward.4
$region0: #{generator_forward.4}
  #allocation0 [shape = 'u32[]', space=smem, size = 0x4, offset = 0x4, fixed_abs, tag = 'smem constant byte address 0x4 - core index']
  #allocation1 [shape = 'u32[72,128]{1,0:T(1,128)}', space=vmem, size = 0x9000, scoped, tag = 'internal scratch']
  %s0 = inlined_call_operand.vmem [shape: bf16[2,128], index: 0, kind: input, shape index: {}]
  %s1 = inlined_call_operand.vmem [shape: bf16[128,2048], index: 1, kind: input, shape index: {}]
  %s2 = inlined_call_operand.vmem [shape: f32[1,2048], index: 2, kind: input, shape index: {}]
  %s3 = inlined_call_operand.vmem [shape: f32[1,2048], index: 3, kind: input, shape index: {}]
  %s4 = inlined_call_operand.vmem [shape: bf16[2,2048], index: 4, kind: output, shape index: {}]
  %s5 = sld [smem:[#allocation0]]
  $region26: #{generator_forward.4} parent=0
    _
  %s7 = ssub.s32 1, %s5
  %s8 = scalar_select 0, %s7, %s5
  // Predicated region
  $region2: #{generator_forward.4} parent=0 // pred_check
    _
  $region3: #{generator_forward.4} parent=0 // pred_check_branch
    %10 = sbr.rel (0) target = $region5
  $region4: #{generator_forward.4} parent=0 // pred_region
    _
  $region5: #{generator_forward.4} parent=0 // pred_fallthru
    _
  // Predicated region
  $region6: #{generator_forward.4} parent=0 // pred_check
    _
  $region7: #{generator_forward.4} parent=0 // pred_check_branch
    %12 = sbr.rel (0) target = $region9
  $region8: #{generator_forward.4} parent=0 // pred_region
    _
  $region9: #{generator_forward.4} parent=0 // pred_fallthru
    _
  // Predicated region
  $region10: #{generator_forward.4} parent=0 // pred_check
    _
  $region11: #{generator_forward.4} parent=0 // pred_check_branch
    %14 = sbr.rel (0) target = $region13
  $region12: #{generator_forward.4} parent=0 // pred_region
    _
  $region13: #{generator_forward.4} parent=0 // pred_fallthru
    _
  // Predicated region
  $region14: #{generator_forward.4} parent=0 // pred_check
    _
  $region15: #{generator_forward.4} parent=0 // pred_check_branch
    %16 = sbr.rel (0) target = $region17
  $region16: #{generator_forward.4} parent=0 // pred_region
    _
  $region17: #{generator_forward.4} parent=0 // pred_fallthru
    _
  %v17 = vld [vmem:[%s0] sm:$0x1]
  %v18 = vld [vmem:[%s1] sm:$0xff]
  %v19 = vld [vmem:[%s1 + $0x8] sm:$0xff]
  %v20 = vld [vmem:[%s1 + $0x10] sm:$0xff]
  %v21 = vld [vmem:[%s1 + $0x18] sm:$0xff]
  %v22 = vld [vmem:[%s1 + $0x20] sm:$0xff]
  %v23 = vld [vmem:[%s1 + $0x28] sm:$0xff]
  %v24 = vld [vmem:[%s1 + $0x30] sm:$0xff]
  %v25 = vld [vmem:[%s1 + $0x38] sm:$0xff]
  %v26 = vld [vmem:[%s1 + $0x40] sm:$0xff]
  %v27 = vld [vmem:[%s1 + $0x48] sm:$0xff]
  %v28 = vld [vmem:[%s1 + $0x50] sm:$0xff]
  %v29 = vld [vmem:[%s1 + $0x58] sm:$0xff]
  %v30 = vld [vmem:[%s1 + $0x60] sm:$0xff]
  %v31 = vld [vmem:[%s1 + $0x68] sm:$0xff]
  %v32 = vld [vmem:[%s1 + $0x70] sm:$0xff]
  %v33 = vld [vmem:[%s1 + $0x78] sm:$0xff]
  %v34 = vld [vmem:[%s1 + $0x80] sm:$0xff]
  %v35 = vld [vmem:[%s1 + $0x88] sm:$0xff]
  %v36 = vld [vmem:[%s1 + $0x90] sm:$0xff]
  %v37 = vld [vmem:[%s1 + $0x98] sm:$0xff]
  %v38 = vld [vmem:[%s1 + $0xa0] sm:$0xff]
  %v39 = vld [vmem:[%s1 + $0xa8] sm:$0xff]
  %v40 = vld [vmem:[%s1 + $0xb0] sm:$0xff]
  %v41 = vld [vmem:[%s1 + $0xb8] sm:$0xff]
  %v42 = vld [vmem:[%s1 + $0xc0] sm:$0xff]
  %v43 = vld [vmem:[%s1 + $0xc8] sm:$0xff]
  %v44 = vld [vmem:[%s1 + $0xd0] sm:$0xff]
  %v45 = vld [vmem:[%s1 + $0xd8] sm:$0xff]
  %v46 = vld [vmem:[%s1 + $0xe0] sm:$0xff]
  %v47 = vld [vmem:[%s1 + $0xe8] sm:$0xff]
  %v48 = vld [vmem:[%s1 + $0xf0] sm:$0xff]
  %v49 = vld [vmem:[%s1 + $0xf8] sm:$0xff]
  %v50 = vld [vmem:[%s1 + $0x100] sm:$0xff]
  %v51 = vld [vmem:[%s1 + $0x108] sm:$0xff]
  %v52 = vld [vmem:[%s1 + $0x110] sm:$0xff]
  %v53 = vld [vmem:[%s1 + $0x118] sm:$0xff]
  %v54 = vld [vmem:[%s1 + $0x120] sm:$0xff]
  %v55 = vld [vmem:[%s1 + $0x128] sm:$0xff]
  %v56 = vld [vmem:[%s1 + $0x130] sm:$0xff]
  %v57 = vld [vmem:[%s1 + $0x138] sm:$0xff]
  %v58 = vld [vmem:[%s1 + $0x140] sm:$0xff]
  %v59 = vld [vmem:[%s1 + $0x148] sm:$0xff]
  %v60 = vld [vmem:[%s1 + $0x150] sm:$0xff]
  %v61 = vld [vmem:[%s1 + $0x158] sm:$0xff]
  %v62 = vld [vmem:[%s1 + $0x160] sm:$0xff]
  %v63 = vld [vmem:[%s1 + $0x168] sm:$0xff]
  %v64 = vld [vmem:[%s1 + $0x170] sm:$0xff]
  %v65 = vld [vmem:[%s1 + $0x178] sm:$0xff]
  %v66 = vld [vmem:[%s1 + $0x180] sm:$0xff]
  %v67 = vld [vmem:[%s1 + $0x188] sm:$0xff]
  %v68 = vld [vmem:[%s1 + $0x190] sm:$0xff]
  %v69 = vld [vmem:[%s1 + $0x198] sm:$0xff]
  %v70 = vld [vmem:[%s1 + $0x1a0] sm:$0xff]
  %v71 = vld [vmem:[%s1 + $0x1a8] sm:$0xff]
  %v72 = vld [vmem:[%s1 + $0x1b0] sm:$0xff]
  %v73 = vld [vmem:[%s1 + $0x1b8] sm:$0xff]
  %v74 = vld [vmem:[%s1 + $0x1c0] sm:$0xff]
  %v75 = vld [vmem:[%s1 + $0x1c8] sm:$0xff]
  %v76 = vld [vmem:[%s1 + $0x1d0] sm:$0xff]
  %v77 = vld [vmem:[%s1 + $0x1d8] sm:$0xff]
  %v78 = vld [vmem:[%s1 + $0x1e0] sm:$0xff]
  %v79 = vld [vmem:[%s1 + $0x1e8] sm:$0xff]
  %v80 = vld [vmem:[%s1 + $0x1f0] sm:$0xff]
  %v81 = vld [vmem:[%s1 + $0x1f8] sm:$0xff]
  %v82 = vld [vmem:[%s1 + $0x200] sm:$0xff]
  %v83 = vld [vmem:[%s1 + $0x208] sm:$0xff]
  %v84 = vld [vmem:[%s1 + $0x210] sm:$0xff]
  %v85 = vld [vmem:[%s1 + $0x218] sm:$0xff]
  %v86 = vld [vmem:[%s1 + $0x220] sm:$0xff]
  %v87 = vld [vmem:[%s1 + $0x228] sm:$0xff]
  %v88 = vld [vmem:[%s1 + $0x230] sm:$0xff]
  %v89 = vld [vmem:[%s1 + $0x238] sm:$0xff]
  %v90 = vld [vmem:[%s1 + $0x240] sm:$0xff]
  %v91 = vld [vmem:[%s1 + $0x248] sm:$0xff]
  %v92 = vld [vmem:[%s1 + $0x250] sm:$0xff]
  %v93 = vld [vmem:[%s1 + $0x258] sm:$0xff]
  %v94 = vld [vmem:[%s1 + $0x260] sm:$0xff]
  %v95 = vld [vmem:[%s1 + $0x268] sm:$0xff]
  %v96 = vld [vmem:[%s1 + $0x270] sm:$0xff]
  %v97 = vld [vmem:[%s1 + $0x278] sm:$0xff]
  %v98 = vld [vmem:[%s1 + $0x280] sm:$0xff]
  %v99 = vld [vmem:[%s1 + $0x288] sm:$0xff]
  %v100 = vld [vmem:[%s1 + $0x290] sm:$0xff]
  %v101 = vld [vmem:[%s1 + $0x298] sm:$0xff]
  %v102 = vld [vmem:[%s1 + $0x2a0] sm:$0xff]
  %v103 = vld [vmem:[%s1 + $0x2a8] sm:$0xff]
  %v104 = vld [vmem:[%s1 + $0x2b0] sm:$0xff]
  %v105 = vld [vmem:[%s1 + $0x2b8] sm:$0xff]
  %v106 = vld [vmem:[%s1 + $0x2c0] sm:$0xff]
  %v107 = vld [vmem:[%s1 + $0x2c8] sm:$0xff]
  %v108 = vld [vmem:[%s1 + $0x2d0] sm:$0xff]
  %v109 = vld [vmem:[%s1 + $0x2d8] sm:$0xff]
  %v110 = vld [vmem:[%s1 + $0x2e0] sm:$0xff]
  %v111 = vld [vmem:[%s1 + $0x2e8] sm:$0xff]
  %v112 = vld [vmem:[%s1 + $0x2f0] sm:$0xff]
  %v113 = vld [vmem:[%s1 + $0x2f8] sm:$0xff]
  %v114 = vld [vmem:[%s1 + $0x300] sm:$0xff]
  %v115 = vld [vmem:[%s1 + $0x308] sm:$0xff]
  %v116 = vld [vmem:[%s1 + $0x310] sm:$0xff]
  %v117 = vld [vmem:[%s1 + $0x318] sm:$0xff]
  %v118 = vld [vmem:[%s1 + $0x320] sm:$0xff]
  %v119 = vld [vmem:[%s1 + $0x328] sm:$0xff]
  %v120 = vld [vmem:[%s1 + $0x330] sm:$0xff]
  %v121 = vld [vmem:[%s1 + $0x338] sm:$0xff]
  %v122 = vld [vmem:[%s1 + $0x340] sm:$0xff]
  %v123 = vld [vmem:[%s1 + $0x348] sm:$0xff]
  %v124 = vld [vmem:[%s1 + $0x350] sm:$0xff]
  %v125 = vld [vmem:[%s1 + $0x358] sm:$0xff]
  %v126 = vld [vmem:[%s1 + $0x360] sm:$0xff]
  %v127 = vld [vmem:[%s1 + $0x368] sm:$0xff]
  %v128 = vld [vmem:[%s1 + $0x370] sm:$0xff]
  %v129 = vld [vmem:[%s1 + $0x378] sm:$0xff]
  %v130 = vld [vmem:[%s1 + $0x380] sm:$0xff]
  %v131 = vld [vmem:[%s1 + $0x388] sm:$0xff]
  %v132 = vld [vmem:[%s1 + $0x390] sm:$0xff]
  %v133 = vld [vmem:[%s1 + $0x398] sm:$0xff]
  %v134 = vld [vmem:[%s1 + $0x3a0] sm:$0xff]
  %v135 = vld [vmem:[%s1 + $0x3a8] sm:$0xff]
  %v136 = vld [vmem:[%s1 + $0x3b0] sm:$0xff]
  %v137 = vld [vmem:[%s1 + $0x3b8] sm:$0xff]
  %v138 = vld [vmem:[%s1 + $0x3c0] sm:$0xff]
  %v139 = vld [vmem:[%s1 + $0x3c8] sm:$0xff]
  %v140 = vld [vmem:[%s1 + $0x3d0] sm:$0xff]
  %v141 = vld [vmem:[%s1 + $0x3d8] sm:$0xff]
  %v142 = vld [vmem:[%s1 + $0x3e0] sm:$0xff]
  %v143 = vld [vmem:[%s1 + $0x3e8] sm:$0xff]
  %v144 = vld [vmem:[%s1 + $0x3f0] sm:$0xff]
  %v145 = vld [vmem:[%s1 + $0x3f8] sm:$0xff]
  %v274 = vunpack.c.l.b16 %v18
  %v275 = vunpack.c.h.b16 %v18
  %v276 = vunpack.c.l.b16 %v19
  %v277 = vunpack.c.h.b16 %v19
  %v278 = vunpack.c.l.b16 %v20
  %v279 = vunpack.c.h.b16 %v20
  %v280 = vunpack.c.l.b16 %v21
  %v281 = vunpack.c.h.b16 %v21
  %v282 = vunpack.c.l.b16 %v22
  %v283 = vunpack.c.h.b16 %v22
  %v284 = vunpack.c.l.b16 %v23
  %v285 = vunpack.c.h.b16 %v23
  %v286 = vunpack.c.l.b16 %v24
  %v287 = vunpack.c.h.b16 %v24
  %v288 = vunpack.c.l.b16 %v25
  %v289 = vunpack.c.h.b16 %v25
  %v290 = vunpack.c.l.b16 %v26
  %v291 = vunpack.c.h.b16 %v26
  %v292 = vunpack.c.l.b16 %v27
  %v293 = vunpack.c.h.b16 %v27
  %v294 = vunpack.c.l.b16 %v28
  %v295 = vunpack.c.h.b16 %v28
  %v296 = vunpack.c.l.b16 %v29
  %v297 = vunpack.c.h.b16 %v29
  %v298 = vunpack.c.l.b16 %v30
  %v299 = vunpack.c.h.b16 %v30
  %v300 = vunpack.c.l.b16 %v31
  %v301 = vunpack.c.h.b16 %v31
  %v302 = vunpack.c.l.b16 %v32
  %v303 = vunpack.c.h.b16 %v32
  %v304 = vunpack.c.l.b16 %v33
  %v305 = vunpack.c.h.b16 %v33
  %v306 = vunpack.c.l.b16 %v34
  %v307 = vunpack.c.h.b16 %v34
  %v308 = vunpack.c.l.b16 %v35
  %v309 = vunpack.c.h.b16 %v35
  %v310 = vunpack.c.l.b16 %v36
  %v311 = vunpack.c.h.b16 %v36
  %v312 = vunpack.c.l.b16 %v37
  %v313 = vunpack.c.h.b16 %v37
  %v314 = vunpack.c.l.b16 %v38
  %v315 = vunpack.c.h.b16 %v38
  %v316 = vunpack.c.l.b16 %v39
  %v317 = vunpack.c.h.b16 %v39
  %v318 = vunpack.c.l.b16 %v40
  %v319 = vunpack.c.h.b16 %v40
  %v320 = vunpack.c.l.b16 %v41
  %v321 = vunpack.c.h.b16 %v41
  %v322 = vunpack.c.l.b16 %v42
  %v323 = vunpack.c.h.b16 %v42
  %v324 = vunpack.c.l.b16 %v43
  %v325 = vunpack.c.h.b16 %v43
  %v326 = vunpack.c.l.b16 %v44
  %v327 = vunpack.c.h.b16 %v44
  %v328 = vunpack.c.l.b16 %v45
  %v329 = vunpack.c.h.b16 %v45
  %v330 = vunpack.c.l.b16 %v46
  %v331 = vunpack.c.h.b16 %v46
  %v332 = vunpack.c.l.b16 %v47
  %v333 = vunpack.c.h.b16 %v47
  %v334 = vunpack.c.l.b16 %v48
  %v335 = vunpack.c.h.b16 %v48
  %v336 = vunpack.c.l.b16 %v49
  %v337 = vunpack.c.h.b16 %v49
  %v338 = vunpack.c.l.b16 %v50
  %v339 = vunpack.c.h.b16 %v50
  %v340 = vunpack.c.l.b16 %v51
  %v341 = vunpack.c.h.b16 %v51
  %v342 = vunpack.c.l.b16 %v52
  %v343 = vunpack.c.h.b16 %v52
  %v344 = vunpack.c.l.b16 %v53
  %v345 = vunpack.c.h.b16 %v53
  %v346 = vunpack.c.l.b16 %v54
  %v347 = vunpack.c.h.b16 %v54
  %v348 = vunpack.c.l.b16 %v55
  %v349 = vunpack.c.h.b16 %v55
  %v350 = vunpack.c.l.b16 %v56
  %v351 = vunpack.c.h.b16 %v56
  %v352 = vunpack.c.l.b16 %v57
  %v353 = vunpack.c.h.b16 %v57
  %v354 = vunpack.c.l.b16 %v58
  %v355 = vunpack.c.h.b16 %v58
  %v356 = vunpack.c.l.b16 %v59
  %v357 = vunpack.c.h.b16 %v59
  %v358 = vunpack.c.l.b16 %v60
  %v359 = vunpack.c.h.b16 %v60
  %v360 = vunpack.c.l.b16 %v61
  %v361 = vunpack.c.h.b16 %v61
  %v362 = vunpack.c.l.b16 %v62
  %v363 = vunpack.c.h.b16 %v62
  %v364 = vunpack.c.l.b16 %v63
  %v365 = vunpack.c.h.b16 %v63
  %v366 = vunpack.c.l.b16 %v64
  %v367 = vunpack.c.h.b16 %v64
  %v368 = vunpack.c.l.b16 %v65
  %v369 = vunpack.c.h.b16 %v65
  %v370 = vunpack.c.l.b16 %v66
  %v371 = vunpack.c.h.b16 %v66
  %v372 = vunpack.c.l.b16 %v67
  %v373 = vunpack.c.h.b16 %v67
  %v374 = vunpack.c.l.b16 %v68
  %v375 = vunpack.c.h.b16 %v68
  %v376 = vunpack.c.l.b16 %v69
  %v377 = vunpack.c.h.b16 %v69
  %v378 = vunpack.c.l.b16 %v70
  %v379 = vunpack.c.h.b16 %v70
  %v380 = vunpack.c.l.b16 %v71
  %v381 = vunpack.c.h.b16 %v71
  %v382 = vunpack.c.l.b16 %v72
  %v383 = vunpack.c.h.b16 %v72
  %v384 = vunpack.c.l.b16 %v73
  %v385 = vunpack.c.h.b16 %v73
  %v386 = vunpack.c.l.b16 %v74
  %v387 = vunpack.c.h.b16 %v74
  %v388 = vunpack.c.l.b16 %v75
  %v389 = vunpack.c.h.b16 %v75
  %v390 = vunpack.c.l.b16 %v76
  %v391 = vunpack.c.h.b16 %v76
  %v392 = vunpack.c.l.b16 %v77
  %v393 = vunpack.c.h.b16 %v77
  %v394 = vunpack.c.l.b16 %v78
  %v395 = vunpack.c.h.b16 %v78
  %v396 = vunpack.c.l.b16 %v79
  %v397 = vunpack.c.h.b16 %v79
  %v398 = vunpack.c.l.b16 %v80
  %v399 = vunpack.c.h.b16 %v80
  %v400 = vunpack.c.l.b16 %v81
  %v401 = vunpack.c.h.b16 %v81
  %v402 = vunpack.c.l.b16 %v82
  %v403 = vunpack.c.h.b16 %v82
  %v404 = vunpack.c.l.b16 %v83
  %v405 = vunpack.c.h.b16 %v83
  %v406 = vunpack.c.l.b16 %v84
  %v407 = vunpack.c.h.b16 %v84
  %v408 = vunpack.c.l.b16 %v85
  %v409 = vunpack.c.h.b16 %v85
  %v410 = vunpack.c.l.b16 %v86
  %v411 = vunpack.c.h.b16 %v86
  %v412 = vunpack.c.l.b16 %v87
  %v413 = vunpack.c.h.b16 %v87
  %v414 = vunpack.c.l.b16 %v88
  %v415 = vunpack.c.h.b16 %v88
  %v416 = vunpack.c.l.b16 %v89
  %v417 = vunpack.c.h.b16 %v89
  %v418 = vunpack.c.l.b16 %v90
  %v419 = vunpack.c.h.b16 %v90
  %v420 = vunpack.c.l.b16 %v91
  %v421 = vunpack.c.h.b16 %v91
  %v422 = vunpack.c.l.b16 %v92
  %v423 = vunpack.c.h.b16 %v92
  %v424 = vunpack.c.l.b16 %v93
  %v425 = vunpack.c.h.b16 %v93
  %v426 = vunpack.c.l.b16 %v94
  %v427 = vunpack.c.h.b16 %v94
  %v428 = vunpack.c.l.b16 %v95
  %v429 = vunpack.c.h.b16 %v95
  %v430 = vunpack.c.l.b16 %v96
  %v431 = vunpack.c.h.b16 %v96
  %v432 = vunpack.c.l.b16 %v97
  %v433 = vunpack.c.h.b16 %v97
  %v434 = vunpack.c.l.b16 %v98
  %v435 = vunpack.c.h.b16 %v98
  %v436 = vunpack.c.l.b16 %v99
  %v437 = vunpack.c.h.b16 %v99
  %v438 = vunpack.c.l.b16 %v100
  %v439 = vunpack.c.h.b16 %v100
  %v440 = vunpack.c.l.b16 %v101
  %v441 = vunpack.c.h.b16 %v101
  %v442 = vunpack.c.l.b16 %v102
  %v443 = vunpack.c.h.b16 %v102
  %v444 = vunpack.c.l.b16 %v103
  %v445 = vunpack.c.h.b16 %v103
  %v446 = vunpack.c.l.b16 %v104
  %v447 = vunpack.c.h.b16 %v104
  %v448 = vunpack.c.l.b16 %v105
  %v449 = vunpack.c.h.b16 %v105
  %v450 = vunpack.c.l.b16 %v106
  %v451 = vunpack.c.h.b16 %v106
  %v452 = vunpack.c.l.b16 %v107
  %v453 = vunpack.c.h.b16 %v107
  %v454 = vunpack.c.l.b16 %v108
  %v455 = vunpack.c.h.b16 %v108
  %v456 = vunpack.c.l.b16 %v109
  %v457 = vunpack.c.h.b16 %v109
  %v458 = vunpack.c.l.b16 %v110
  %v459 = vunpack.c.h.b16 %v110
  %v460 = vunpack.c.l.b16 %v111
  %v461 = vunpack.c.h.b16 %v111
  %v462 = vunpack.c.l.b16 %v112
  %v463 = vunpack.c.h.b16 %v112
  %v464 = vunpack.c.l.b16 %v113
  %v465 = vunpack.c.h.b16 %v113
  %v466 = vunpack.c.l.b16 %v114
  %v467 = vunpack.c.h.b16 %v114
  %v468 = vunpack.c.l.b16 %v115
  %v469 = vunpack.c.h.b16 %v115
  %v470 = vunpack.c.l.b16 %v116
  %v471 = vunpack.c.h.b16 %v116
  %v472 = vunpack.c.l.b16 %v117
  %v473 = vunpack.c.h.b16 %v117
  %v474 = vunpack.c.l.b16 %v118
  %v475 = vunpack.c.h.b16 %v118
  %v476 = vunpack.c.l.b16 %v119
  %v477 = vunpack.c.h.b16 %v119
  %v478 = vunpack.c.l.b16 %v120
  %v479 = vunpack.c.h.b16 %v120
  %v480 = vunpack.c.l.b16 %v121
  %v481 = vunpack.c.h.b16 %v121
  %v482 = vunpack.c.l.b16 %v122
  %v483 = vunpack.c.h.b16 %v122
  %v484 = vunpack.c.l.b16 %v123
  %v485 = vunpack.c.h.b16 %v123
  %v486 = vunpack.c.l.b16 %v124
  %v487 = vunpack.c.h.b16 %v124
  %v488 = vunpack.c.l.b16 %v125
  %v489 = vunpack.c.h.b16 %v125
  %v490 = vunpack.c.l.b16 %v126
  %v491 = vunpack.c.h.b16 %v126
  %v492 = vunpack.c.l.b16 %v127
  %v493 = vunpack.c.h.b16 %v127
  %v494 = vunpack.c.l.b16 %v128
  %v495 = vunpack.c.h.b16 %v128
  %v496 = vunpack.c.l.b16 %v129
  %v497 = vunpack.c.h.b16 %v129
  %v498 = vunpack.c.l.b16 %v130
  %v499 = vunpack.c.h.b16 %v130
  %v500 = vunpack.c.l.b16 %v131
  %v501 = vunpack.c.h.b16 %v131
  %v502 = vunpack.c.l.b16 %v132
  %v503 = vunpack.c.h.b16 %v132
  %v504 = vunpack.c.l.b16 %v133
  %v505 = vunpack.c.h.b16 %v133
  %v506 = vunpack.c.l.b16 %v134
  %v507 = vunpack.c.h.b16 %v134
  %v508 = vunpack.c.l.b16 %v135
  %v509 = vunpack.c.h.b16 %v135
  %v510 = vunpack.c.l.b16 %v136
  %v511 = vunpack.c.h.b16 %v136
  %v512 = vunpack.c.l.b16 %v137
  %v513 = vunpack.c.h.b16 %v137
  %v514 = vunpack.c.l.b16 %v138
  %v515 = vunpack.c.h.b16 %v138
  %v516 = vunpack.c.l.b16 %v139
  %v517 = vunpack.c.h.b16 %v139
  %v518 = vunpack.c.l.b16 %v140
  %v519 = vunpack.c.h.b16 %v140
  %v520 = vunpack.c.l.b16 %v141
  %v521 = vunpack.c.h.b16 %v141
  %v522 = vunpack.c.l.b16 %v142
  %v523 = vunpack.c.h.b16 %v142
  %v524 = vunpack.c.l.b16 %v143
  %v525 = vunpack.c.h.b16 %v143
  %v526 = vunpack.c.l.b16 %v144
  %v527 = vunpack.c.h.b16 %v144
  %v528 = vunpack.c.l.b16 %v145
  %v529 = vunpack.c.h.b16 %v145
  %v530 = vpack.c.b16 %v290, %v274
  %v531 = vpack.c.b16 %v291, %v275
  %v532 = vpack.c.b16 %v292, %v276
  %v533 = vpack.c.b16 %v293, %v277
  %v534 = vpack.c.b16 %v294, %v278
  %v535 = vpack.c.b16 %v295, %v279
  %v536 = vpack.c.b16 %v296, %v280
  %v537 = vpack.c.b16 %v297, %v281
  %v538 = vpack.c.b16 %v298, %v282
  %v539 = vpack.c.b16 %v299, %v283
  %v540 = vpack.c.b16 %v300, %v284
  %v541 = vpack.c.b16 %v301, %v285
  %v542 = vpack.c.b16 %v302, %v286
  %v543 = vpack.c.b16 %v303, %v287
  %v544 = vpack.c.b16 %v304, %v288
  %v545 = vpack.c.b16 %v305, %v289
  %v546 = vpack.c.b16 %v322, %v306
  %v547 = vpack.c.b16 %v323, %v307
  %v548 = vpack.c.b16 %v324, %v308
  %v549 = vpack.c.b16 %v325, %v309
  %v550 = vpack.c.b16 %v326, %v310
  %v551 = vpack.c.b16 %v327, %v311
  %v552 = vpack.c.b16 %v328, %v312
  %v553 = vpack.c.b16 %v329, %v313
  %v554 = vpack.c.b16 %v330, %v314
  %v555 = vpack.c.b16 %v331, %v315
  %v556 = vpack.c.b16 %v332, %v316
  %v557 = vpack.c.b16 %v333, %v317
  %v558 = vpack.c.b16 %v334, %v318
  %v559 = vpack.c.b16 %v335, %v319
  %v560 = vpack.c.b16 %v336, %v320
  %v561 = vpack.c.b16 %v337, %v321
  %v562 = vpack.c.b16 %v354, %v338
  %v563 = vpack.c.b16 %v355, %v339
  %v564 = vpack.c.b16 %v356, %v340
  %v565 = vpack.c.b16 %v357, %v341
  %v566 = vpack.c.b16 %v358, %v342
  %v567 = vpack.c.b16 %v359, %v343
  %v568 = vpack.c.b16 %v360, %v344
  %v569 = vpack.c.b16 %v361, %v345
  %v570 = vpack.c.b16 %v362, %v346
  %v571 = vpack.c.b16 %v363, %v347
  %v572 = vpack.c.b16 %v364, %v348
  %v573 = vpack.c.b16 %v365, %v349
  %v574 = vpack.c.b16 %v366, %v350
  %v575 = vpack.c.b16 %v367, %v351
  %v576 = vpack.c.b16 %v368, %v352
  %v577 = vpack.c.b16 %v369, %v353
  %v578 = vpack.c.b16 %v386, %v370
  %v579 = vpack.c.b16 %v387, %v371
  %v580 = vpack.c.b16 %v388, %v372
  %v581 = vpack.c.b16 %v389, %v373
  %v582 = vpack.c.b16 %v390, %v374
  %v583 = vpack.c.b16 %v391, %v375
  %v584 = vpack.c.b16 %v392, %v376
  %v585 = vpack.c.b16 %v393, %v377
  %v586 = vpack.c.b16 %v394, %v378
  %v587 = vpack.c.b16 %v395, %v379
  %v588 = vpack.c.b16 %v396, %v380
  %v589 = vpack.c.b16 %v397, %v381
  %v590 = vpack.c.b16 %v398, %v382
  %v591 = vpack.c.b16 %v399, %v383
  %v592 = vpack.c.b16 %v400, %v384
  %v593 = vpack.c.b16 %v401, %v385
  %v594 = vpack.c.b16 %v418, %v402
  %v595 = vpack.c.b16 %v419, %v403
  %v596 = vpack.c.b16 %v420, %v404
  %v597 = vpack.c.b16 %v421, %v405
  %v598 = vpack.c.b16 %v422, %v406
  %v599 = vpack.c.b16 %v423, %v407
  %v600 = vpack.c.b16 %v424, %v408
  %v601 = vpack.c.b16 %v425, %v409
  %v602 = vpack.c.b16 %v426, %v410
  %v603 = vpack.c.b16 %v427, %v411
  %v604 = vpack.c.b16 %v428, %v412
  %v605 = vpack.c.b16 %v429, %v413
  %v606 = vpack.c.b16 %v430, %v414
  %v607 = vpack.c.b16 %v431, %v415
  %v608 = vpack.c.b16 %v432, %v416
  %v609 = vpack.c.b16 %v433, %v417
  %v610 = vpack.c.b16 %v450, %v434
  %v611 = vpack.c.b16 %v451, %v435
  %v612 = vpack.c.b16 %v452, %v436
  %v613 = vpack.c.b16 %v453, %v437
  %v614 = vpack.c.b16 %v454, %v438
  %v615 = vpack.c.b16 %v455, %v439
  %v616 = vpack.c.b16 %v456, %v440
  %v617 = vpack.c.b16 %v457, %v441
  %v618 = vpack.c.b16 %v458, %v442
  %v619 = vpack.c.b16 %v459, %v443
  %v620 = vpack.c.b16 %v460, %v444
  %v621 = vpack.c.b16 %v461, %v445
  %v622 = vpack.c.b16 %v462, %v446
  %v623 = vpack.c.b16 %v463, %v447
  %v624 = vpack.c.b16 %v464, %v448
  %v625 = vpack.c.b16 %v465, %v449
  %v626 = vpack.c.b16 %v482, %v466
  %v627 = vpack.c.b16 %v483, %v467
  %v628 = vpack.c.b16 %v484, %v468
  %v629 = vpack.c.b16 %v485, %v469
  %v630 = vpack.c.b16 %v486, %v470
  %v631 = vpack.c.b16 %v487, %v471
  %v632 = vpack.c.b16 %v488, %v472
  %v633 = vpack.c.b16 %v489, %v473
  %v634 = vpack.c.b16 %v490, %v474
  %v635 = vpack.c.b16 %v491, %v475
  %v636 = vpack.c.b16 %v492, %v476
  %v637 = vpack.c.b16 %v493, %v477
  %v638 = vpack.c.b16 %v494, %v478
  %v639 = vpack.c.b16 %v495, %v479
  %v640 = vpack.c.b16 %v496, %v480
  %v641 = vpack.c.b16 %v497, %v481
  %v642 = vpack.c.b16 %v514, %v498
  %v643 = vpack.c.b16 %v515, %v499
  %v644 = vpack.c.b16 %v516, %v500
  %v645 = vpack.c.b16 %v517, %v501
  %v646 = vpack.c.b16 %v518, %v502
  %v647 = vpack.c.b16 %v519, %v503
  %v648 = vpack.c.b16 %v520, %v504
  %v649 = vpack.c.b16 %v521, %v505
  %v650 = vpack.c.b16 %v522, %v506
  %v651 = vpack.c.b16 %v523, %v507
  %v652 = vpack.c.b16 %v524, %v508
  %v653 = vpack.c.b16 %v525, %v509
  %v654 = vpack.c.b16 %v526, %v510
  %v655 = vpack.c.b16 %v527, %v511
  %v656 = vpack.c.b16 %v528, %v512
  %v657 = vpack.c.b16 %v529, %v513
  %786 = vmatpush.bf16.msra.mxu0 %v642
  %787 = vmatpush.bf16.msra.mxu0 %v626
  %788 = vmatpush.bf16.msra.mxu0 %v610
  %789 = vmatpush.bf16.msra.mxu0 %v594
  %790 = vmatpush.bf16.msra.mxu0 %v578
  %791 = vmatpush.bf16.msra.mxu0 %v562
  %792 = vmatpush.bf16.msra.mxu0 %v546
  %793 = vmatpush.bf16.msra.mxu0 %v530
  %794 = vmatmul.bf16.gmra.mxu0 %v17
  %v795 = vpop.f32.mrf.mxu0
  %v796 = vadd.f32 0.0, %v795
  %v797 = vpop.f32.mrf.mxu0
  %798 = vdwg.mxu0
  %799 = vmatpush.bf16.msra.mxu0 %v643
  %800 = vmatpush.bf16.msra.mxu0 %v627
  %801 = vmatpush.bf16.msra.mxu0 %v611
  %802 = vmatpush.bf16.msra.mxu0 %v595
  %803 = vmatpush.bf16.msra.mxu0 %v579
  %804 = vmatpush.bf16.msra.mxu0 %v563
  %805 = vmatpush.bf16.msra.mxu0 %v547
  %806 = vmatpush.bf16.msra.mxu0 %v531
  %807 = vmatmul.bf16.gmra.mxu0 %v17
  %v808 = vpop.f32.mrf.mxu0
  %v809 = vadd.f32 0.0, %v808
  %v810 = vpop.f32.mrf.mxu0
  %811 = vdwg.mxu0
  %812 = vmatpush.bf16.msra.mxu0 %v644
  %813 = vmatpush.bf16.msra.mxu0 %v628
  %814 = vmatpush.bf16.msra.mxu0 %v612
  %815 = vmatpush.bf16.msra.mxu0 %v596
  %816 = vmatpush.bf16.msra.mxu0 %v580
  %817 = vmatpush.bf16.msra.mxu0 %v564
  %818 = vmatpush.bf16.msra.mxu0 %v548
  %819 = vmatpush.bf16.msra.mxu0 %v532
  %820 = vmatmul.bf16.gmra.mxu0 %v17
  %v821 = vpop.f32.mrf.mxu0
  %v822 = vadd.f32 0.0, %v821
  %v823 = vpop.f32.mrf.mxu0
  %824 = vdwg.mxu0
  %825 = vmatpush.bf16.msra.mxu0 %v645
  %826 = vmatpush.bf16.msra.mxu0 %v629
  %827 = vmatpush.bf16.msra.mxu0 %v613
  %828 = vmatpush.bf16.msra.mxu0 %v597
  %829 = vmatpush.bf16.msra.mxu0 %v581
  %830 = vmatpush.bf16.msra.mxu0 %v565
  %831 = vmatpush.bf16.msra.mxu0 %v549
  %832 = vmatpush.bf16.msra.mxu0 %v533
  %833 = vmatmul.bf16.gmra.mxu0 %v17
  %v834 = vpop.f32.mrf.mxu0
  %v835 = vadd.f32 0.0, %v834
  %v836 = vpop.f32.mrf.mxu0
  %837 = vdwg.mxu0
  %838 = vmatpush.bf16.msra.mxu0 %v646
  %839 = vmatpush.bf16.msra.mxu0 %v630
  %840 = vmatpush.bf16.msra.mxu0 %v614
  %841 = vmatpush.bf16.msra.mxu0 %v598
  %842 = vmatpush.bf16.msra.mxu0 %v582
  %843 = vmatpush.bf16.msra.mxu0 %v566
  %844 = vmatpush.bf16.msra.mxu0 %v550
  %845 = vmatpush.bf16.msra.mxu0 %v534
  %846 = vmatmul.bf16.gmra.mxu0 %v17
  %v847 = vpop.f32.mrf.mxu0
  %v848 = vadd.f32 0.0, %v847
  %v849 = vpop.f32.mrf.mxu0
  %850 = vdwg.mxu0
  %851 = vmatpush.bf16.msra.mxu0 %v647
  %852 = vmatpush.bf16.msra.mxu0 %v631
  %853 = vmatpush.bf16.msra.mxu0 %v615
  %854 = vmatpush.bf16.msra.mxu0 %v599
  %855 = vmatpush.bf16.msra.mxu0 %v583
  %856 = vmatpush.bf16.msra.mxu0 %v567
  %857 = vmatpush.bf16.msra.mxu0 %v551
  %858 = vmatpush.bf16.msra.mxu0 %v535
  %859 = vmatmul.bf16.gmra.mxu0 %v17
  %v860 = vpop.f32.mrf.mxu0
  %v861 = vadd.f32 0.0, %v860
  %v862 = vpop.f32.mrf.mxu0
  %863 = vdwg.mxu0
  %864 = vmatpush.bf16.msra.mxu0 %v648
  %865 = vmatpush.bf16.msra.mxu0 %v632
  %866 = vmatpush.bf16.msra.mxu0 %v616
  %867 = vmatpush.bf16.msra.mxu0 %v600
  %868 = vmatpush.bf16.msra.mxu0 %v584
  %869 = vmatpush.bf16.msra.mxu0 %v568
  %870 = vmatpush.bf16.msra.mxu0 %v552
  %871 = vmatpush.bf16.msra.mxu0 %v536
  %872 = vmatmul.bf16.gmra.mxu0 %v17
  %v873 = vpop.f32.mrf.mxu0
  %v874 = vadd.f32 0.0, %v873
  %v875 = vpop.f32.mrf.mxu0
  %876 = vdwg.mxu0
  %877 = vmatpush.bf16.msra.mxu0 %v649
  %878 = vmatpush.bf16.msra.mxu0 %v633
  %879 = vmatpush.bf16.msra.mxu0 %v617
  %880 = vmatpush.bf16.msra.mxu0 %v601
  %881 = vmatpush.bf16.msra.mxu0 %v585
  %882 = vmatpush.bf16.msra.mxu0 %v569
  %883 = vmatpush.bf16.msra.mxu0 %v553
  %884 = vmatpush.bf16.msra.mxu0 %v537
  %885 = vmatmul.bf16.gmra.mxu0 %v17
  %v886 = vpop.f32.mrf.mxu0
  %v887 = vadd.f32 0.0, %v886
  %v888 = vpop.f32.mrf.mxu0
  %889 = vdwg.mxu0
  %890 = vmatpush.bf16.msra.mxu0 %v650
  %891 = vmatpush.bf16.msra.mxu0 %v634
  %892 = vmatpush.bf16.msra.mxu0 %v618
  %893 = vmatpush.bf16.msra.mxu0 %v602
  %894 = vmatpush.bf16.msra.mxu0 %v586
  %895 = vmatpush.bf16.msra.mxu0 %v570
  %896 = vmatpush.bf16.msra.mxu0 %v554
  %897 = vmatpush.bf16.msra.mxu0 %v538
  %898 = vmatmul.bf16.gmra.mxu0 %v17
  %v899 = vpop.f32.mrf.mxu0
  %v900 = vadd.f32 0.0, %v899
  %v901 = vpop.f32.mrf.mxu0
  %902 = vdwg.mxu0
  %903 = vmatpush.bf16.msra.mxu0 %v651
  %904 = vmatpush.bf16.msra.mxu0 %v635
  %905 = vmatpush.bf16.msra.mxu0 %v619
  %906 = vmatpush.bf16.msra.mxu0 %v603
  %907 = vmatpush.bf16.msra.mxu0 %v587
  %908 = vmatpush.bf16.msra.mxu0 %v571
  %909 = vmatpush.bf16.msra.mxu0 %v555
  %910 = vmatpush.bf16.msra.mxu0 %v539
  %911 = vmatmul.bf16.gmra.mxu0 %v17
  %v912 = vpop.f32.mrf.mxu0
  %v913 = vadd.f32 0.0, %v912
  %v914 = vpop.f32.mrf.mxu0
  %915 = vdwg.mxu0
  %916 = vmatpush.bf16.msra.mxu0 %v652
  %917 = vmatpush.bf16.msra.mxu0 %v636
  %918 = vmatpush.bf16.msra.mxu0 %v620
  %919 = vmatpush.bf16.msra.mxu0 %v604
  %920 = vmatpush.bf16.msra.mxu0 %v588
  %921 = vmatpush.bf16.msra.mxu0 %v572
  %922 = vmatpush.bf16.msra.mxu0 %v556
  %923 = vmatpush.bf16.msra.mxu0 %v540
  %924 = vmatmul.bf16.gmra.mxu0 %v17
  %v925 = vpop.f32.mrf.mxu0
  %v926 = vadd.f32 0.0, %v925
  %v927 = vpop.f32.mrf.mxu0
  %928 = vdwg.mxu0
  %929 = vmatpush.bf16.msra.mxu0 %v653
  %930 = vmatpush.bf16.msra.mxu0 %v637
  %931 = vmatpush.bf16.msra.mxu0 %v621
  %932 = vmatpush.bf16.msra.mxu0 %v605
  %933 = vmatpush.bf16.msra.mxu0 %v589
  %934 = vmatpush.bf16.msra.mxu0 %v573
  %935 = vmatpush.bf16.msra.mxu0 %v557
  %936 = vmatpush.bf16.msra.mxu0 %v541
  %937 = vmatmul.bf16.gmra.mxu0 %v17
  %v938 = vpop.f32.mrf.mxu0
  %v939 = vadd.f32 0.0, %v938
  %v940 = vpop.f32.mrf.mxu0
  %941 = vdwg.mxu0
  %942 = vmatpush.bf16.msra.mxu0 %v654
  %943 = vmatpush.bf16.msra.mxu0 %v638
  %944 = vmatpush.bf16.msra.mxu0 %v622
  %945 = vmatpush.bf16.msra.mxu0 %v606
  %946 = vmatpush.bf16.msra.mxu0 %v590
  %947 = vmatpush.bf16.msra.mxu0 %v574
  %948 = vmatpush.bf16.msra.mxu0 %v558
  %949 = vmatpush.bf16.msra.mxu0 %v542
  %950 = vmatmul.bf16.gmra.mxu0 %v17
  %v951 = vpop.f32.mrf.mxu0
  %v952 = vadd.f32 0.0, %v951
  %v953 = vpop.f32.mrf.mxu0
  %954 = vdwg.mxu0
  %955 = vmatpush.bf16.msra.mxu0 %v655
  %956 = vmatpush.bf16.msra.mxu0 %v639
  %957 = vmatpush.bf16.msra.mxu0 %v623
  %958 = vmatpush.bf16.msra.mxu0 %v607
  %959 = vmatpush.bf16.msra.mxu0 %v591
  %960 = vmatpush.bf16.msra.mxu0 %v575
  %961 = vmatpush.bf16.msra.mxu0 %v559
  %962 = vmatpush.bf16.msra.mxu0 %v543
  %963 = vmatmul.bf16.gmra.mxu0 %v17
  %v964 = vpop.f32.mrf.mxu0
  %v965 = vadd.f32 0.0, %v964
  %v966 = vpop.f32.mrf.mxu0
  %967 = vdwg.mxu0
  %968 = vmatpush.bf16.msra.mxu0 %v656
  %969 = vmatpush.bf16.msra.mxu0 %v640
  %970 = vmatpush.bf16.msra.mxu0 %v624
  %971 = vmatpush.bf16.msra.mxu0 %v608
  %972 = vmatpush.bf16.msra.mxu0 %v592
  %973 = vmatpush.bf16.msra.mxu0 %v576
  %974 = vmatpush.bf16.msra.mxu0 %v560
  %975 = vmatpush.bf16.msra.mxu0 %v544
  %976 = vmatmul.bf16.gmra.mxu0 %v17
  %v977 = vpop.f32.mrf.mxu0
  %v978 = vadd.f32 0.0, %v977
  %v979 = vpop.f32.mrf.mxu0
  %980 = vdwg.mxu0
  %981 = vmatpush.bf16.msra.mxu0 %v657
  %982 = vmatpush.bf16.msra.mxu0 %v641
  %983 = vmatpush.bf16.msra.mxu0 %v625
  %984 = vmatpush.bf16.msra.mxu0 %v609
  %985 = vmatpush.bf16.msra.mxu0 %v593
  %986 = vmatpush.bf16.msra.mxu0 %v577
  %987 = vmatpush.bf16.msra.mxu0 %v561
  %988 = vmatpush.bf16.msra.mxu0 %v545
  %989 = vmatmul.bf16.gmra.mxu0 %v17
  %v990 = vpop.f32.mrf.mxu0
  %v991 = vadd.f32 0.0, %v990
  %v992 = vpop.f32.mrf.mxu0
  %993 = vdwg.mxu0
  %v994 = vld [vmem:[%s2] sm:$0xff]
  %v995 = vld [vmem:[%s2 + $0x8] sm:$0xff]
  %v998 = vperm.slane %v994, 0
  %v999 = vperm.slane %v994, 1
  %v1000 = vperm.slane %v994, 2
  %v1001 = vperm.slane %v994, 3
  %v1002 = vperm.slane %v994, 4
  %v1003 = vperm.slane %v994, 5
  %v1004 = vperm.slane %v994, 6
  %v1005 = vperm.slane %v994, 7
  %v1006 = vperm.slane %v995, 0
  %v1007 = vperm.slane %v995, 1
  %v1008 = vperm.slane %v995, 2
  %v1009 = vperm.slane %v995, 3
  %v1010 = vperm.slane %v995, 4
  %v1011 = vperm.slane %v995, 5
  %v1012 = vperm.slane %v995, 6
  %v1013 = vperm.slane %v995, 7
  %v1030 = vmul.f32 %v796, %v998
  %v1031 = vmul.f32 %v809, %v999
  %v1032 = vmul.f32 %v822, %v1000
  %v1033 = vmul.f32 %v835, %v1001
  %v1034 = vmul.f32 %v848, %v1002
  %v1035 = vmul.f32 %v861, %v1003
  %v1036 = vmul.f32 %v874, %v1004
  %v1037 = vmul.f32 %v887, %v1005
  %v1038 = vmul.f32 %v900, %v1006
  %v1039 = vmul.f32 %v913, %v1007
  %v1040 = vmul.f32 %v926, %v1008
  %v1041 = vmul.f32 %v939, %v1009
  %v1042 = vmul.f32 %v952, %v1010
  %v1043 = vmul.f32 %v965, %v1011
  %v1044 = vmul.f32 %v978, %v1012
  %v1045 = vmul.f32 %v991, %v1013
  %v1046 = vld [vmem:[%s3] sm:$0xff]
  %v1047 = vld [vmem:[%s3 + $0x8] sm:$0xff]
  %v1050 = vperm.slane %v1046, 0
  %v1051 = vperm.slane %v1046, 1
  %v1052 = vperm.slane %v1046, 2
  %v1053 = vperm.slane %v1046, 3
  %v1054 = vperm.slane %v1046, 4
  %v1055 = vperm.slane %v1046, 5
  %v1056 = vperm.slane %v1046, 6
  %v1057 = vperm.slane %v1046, 7
  %v1058 = vperm.slane %v1047, 0
  %v1059 = vperm.slane %v1047, 1
  %v1060 = vperm.slane %v1047, 2
  %v1061 = vperm.slane %v1047, 3
  %v1062 = vperm.slane %v1047, 4
  %v1063 = vperm.slane %v1047, 5
  %v1064 = vperm.slane %v1047, 6
  %v1065 = vperm.slane %v1047, 7
  %v1082 = vadd.f32 %v1030, %v1050
  %v1083 = vadd.f32 %v1031, %v1051
  %v1084 = vadd.f32 %v1032, %v1052
  %v1085 = vadd.f32 %v1033, %v1053
  %v1086 = vadd.f32 %v1034, %v1054
  %v1087 = vadd.f32 %v1035, %v1055
  %v1088 = vadd.f32 %v1036, %v1056
  %v1089 = vadd.f32 %v1037, %v1057
  %v1090 = vadd.f32 %v1038, %v1058
  %v1091 = vadd.f32 %v1039, %v1059
  %v1092 = vadd.f32 %v1040, %v1060
  %v1093 = vadd.f32 %v1041, %v1061
  %v1094 = vadd.f32 %v1042, %v1062
  %v1095 = vadd.f32 %v1043, %v1063
  %v1096 = vadd.f32 %v1044, %v1064
  %v1097 = vadd.f32 %v1045, %v1065
  %v1098 = vmax.f32 %v1082, 0.0
  %v1099 = vmax.f32 %v1083, 0.0
  %v1100 = vmax.f32 %v1084, 0.0
  %v1101 = vmax.f32 %v1085, 0.0
  %v1102 = vmax.f32 %v1086, 0.0
  %v1103 = vmax.f32 %v1087, 0.0
  %v1104 = vmax.f32 %v1088, 0.0
  %v1105 = vmax.f32 %v1089, 0.0
  %v1106 = vmax.f32 %v1090, 0.0
  %v1107 = vmax.f32 %v1091, 0.0
  %v1108 = vmax.f32 %v1092, 0.0
  %v1109 = vmax.f32 %v1093, 0.0
  %v1110 = vmax.f32 %v1094, 0.0
  %v1111 = vmax.f32 %v1095, 0.0
  %v1112 = vmax.f32 %v1096, 0.0
  %v1113 = vmax.f32 %v1097, 0.0
  %v1114 = vpack.c.bf16 %v1099, %v1098
  %v1115 = vpack.c.bf16 %v1101, %v1100
  %v1116 = vpack.c.bf16 %v1103, %v1102
  %v1117 = vpack.c.bf16 %v1105, %v1104
  %v1118 = vpack.c.bf16 %v1107, %v1106
  %v1119 = vpack.c.bf16 %v1109, %v1108
  %v1120 = vpack.c.bf16 %v1111, %v1110
  %v1121 = vpack.c.bf16 %v1113, %v1112
  %v1130 = vrot.slane %v1114, 3
  %v1131 = vrot.slane %v1115, 6
  %v1132 = vrot.slane %v1115, 1
  %v1133 = vrot.slane %v1116, 4
  %v1134 = vrot.slane %v1116, 7
  %v1135 = vrot.slane %v1117, 2
  %v1136 = vrot.slane %v1117, 5
  %v1137 = vrot.slane %v1118, 3
  %v1138 = vrot.slane %v1119, 6
  %v1139 = vrot.slane %v1119, 1
  %v1140 = vrot.slane %v1120, 4
  %v1141 = vrot.slane %v1120, 7
  %v1142 = vrot.slane %v1121, 2
  %v1143 = vrot.slane %v1121, 5
  %vm1144 = vcmask 1040384
  %v1147 = vsel %vm1144, %v1114, %v1130
  %vm1148 = vcmask 1042434
  %v1151 = vsel %vm1148, %v1131, %v1132
  %vm1152 = vcmask 1041408
  %v1153 = vsel %vm1152, %v1147, %v1151
  %vm1154 = vcmask 1044484
  %v1157 = vsel %vm1154, %v1133, %v1134
  %vm1158 = vcmask 1046534
  %v1161 = vsel %vm1158, %v1135, %v1136
  %vm1162 = vcmask 1045508
  %v1163 = vsel %vm1162, %v1157, %v1161
  %vm1164 = vcmask 1043456
  %v1165 = vsel %vm1164, %v1153, %v1163
  %v1168 = vsel %vm1144, %v1118, %v1137
  %v1171 = vsel %vm1148, %v1138, %v1139
  %v1172 = vsel %vm1152, %v1168, %v1171
  %v1175 = vsel %vm1154, %v1140, %v1141
  %v1178 = vsel %vm1158, %v1142, %v1143
  %v1179 = vsel %vm1162, %v1175, %v1178
  %v1180 = vsel %vm1164, %v1172, %v1179
  %1183 = vst [vmem:[%s4] sm:$0xff] %v1165
  %1184 = vst [vmem:[%s4 + $0x8] sm:$0xff] %v1180
  // Predicated region
  $region18: #{generator_forward.4} parent=0 // pred_check
    _
  $region19: #{generator_forward.4} parent=0 // pred_check_branch
    %1186 = sbr.rel (0) target = $region21
  $region20: #{generator_forward.4} parent=0 // pred_region
    _
  $region21: #{generator_forward.4} parent=0 // pred_fallthru
    _
  // Predicated region
  $region22: #{generator_forward.4} parent=0 // pred_check
    _
  $region23: #{generator_forward.4} parent=0 // pred_check_branch
    %1188 = sbr.rel (0) target = $region25
  $region24: #{generator_forward.4} parent=0 // pred_region
    _
  $region25: #{generator_forward.4} parent=0 // pred_fallthru
    _

// kernel: generator_forward.6
$region0: #{generator_forward.6}
  #allocation0 [shape = 'u32[]', space=smem, size = 0x4, offset = 0x4, fixed_abs, tag = 'smem constant byte address 0x4 - core index']
  #allocation1 [shape = 'u32[72,128]{1,0:T(1,128)}', space=vmem, size = 0x9000, scoped, tag = 'internal scratch']
  %s0 = inlined_call_operand.vmem [shape: bf16[128,64], index: 0, kind: input, shape index: {}]
  %s1 = inlined_call_operand.vmem [shape: bf16[64,128], index: 1, kind: input, shape index: {}]
  %s2 = inlined_call_operand.vmem [shape: f32[1,128], index: 2, kind: input, shape index: {}]
  %s3 = inlined_call_operand.vmem [shape: f32[1,128], index: 3, kind: input, shape index: {}]
  %s4 = inlined_call_operand.vmem [shape: bf16[128,128], index: 4, kind: output, shape index: {}]
  %s5 = sld [smem:[#allocation0]]
  $region26: #{generator_forward.6} parent=0
    _
  %s7 = ssub.s32 1, %s5
  %s8 = scalar_select 0, %s7, %s5
  // Predicated region
  $region2: #{generator_forward.6} parent=0 // pred_check
    _
  $region3: #{generator_forward.6} parent=0 // pred_check_branch
    %10 = sbr.rel (0) target = $region5
  $region4: #{generator_forward.6} parent=0 // pred_region
    _
  $region5: #{generator_forward.6} parent=0 // pred_fallthru
    _
  // Predicated region
  $region6: #{generator_forward.6} parent=0 // pred_check
    _
  $region7: #{generator_forward.6} parent=0 // pred_check_branch
    %12 = sbr.rel (0) target = $region9
  $region8: #{generator_forward.6} parent=0 // pred_region
    _
  $region9: #{generator_forward.6} parent=0 // pred_fallthru
    _
  // Predicated region
  $region10: #{generator_forward.6} parent=0 // pred_check
    _
  $region11: #{generator_forward.6} parent=0 // pred_check_branch
    %14 = sbr.rel (0) target = $region13
  $region12: #{generator_forward.6} parent=0 // pred_region
    _
  $region13: #{generator_forward.6} parent=0 // pred_fallthru
    _
  // Predicated region
  $region14: #{generator_forward.6} parent=0 // pred_check
    _
  $region15: #{generator_forward.6} parent=0 // pred_check_branch
    %16 = sbr.rel (0) target = $region17
  $region16: #{generator_forward.6} parent=0 // pred_region
    _
  $region17: #{generator_forward.6} parent=0 // pred_fallthru
    _
  %v18 = vld [vmem:[%s0] sm:$0xf]
  %v19 = vld [vmem:[%s0 + $0x4] sm:$0xf]
  %v20 = vld [vmem:[%s0 + $0x8] sm:$0xf]
  %v21 = vld [vmem:[%s0 + $0xc] sm:$0xf]
  %v22 = vld [vmem:[%s0 + $0x10] sm:$0xf]
  %v23 = vld [vmem:[%s0 + $0x14] sm:$0xf]
  %v24 = vld [vmem:[%s0 + $0x18] sm:$0xf]
  %v25 = vld [vmem:[%s0 + $0x1c] sm:$0xf]
  %v26 = vld [vmem:[%s0 + $0x20] sm:$0xf]
  %v27 = vld [vmem:[%s0 + $0x24] sm:$0xf]
  %v28 = vld [vmem:[%s0 + $0x28] sm:$0xf]
  %v29 = vld [vmem:[%s0 + $0x2c] sm:$0xf]
  %v30 = vld [vmem:[%s0 + $0x30] sm:$0xf]
  %v31 = vld [vmem:[%s0 + $0x34] sm:$0xf]
  %v32 = vld [vmem:[%s0 + $0x38] sm:$0xf]
  %v33 = vld [vmem:[%s0 + $0x3c] sm:$0xf]
  %v34 = vld [vmem:[%s1] sm:$0xf]
  %v35 = vld [vmem:[%s1 + $0x4] sm:$0xf]
  %v36 = vld [vmem:[%s1 + $0x8] sm:$0xf]
  %v37 = vld [vmem:[%s1 + $0xc] sm:$0xf]
  %v38 = vld [vmem:[%s1 + $0x10] sm:$0xf]
  %v39 = vld [vmem:[%s1 + $0x14] sm:$0xf]
  %v40 = vld [vmem:[%s1 + $0x18] sm:$0xf]
  %v41 = vld [vmem:[%s1 + $0x1c] sm:$0xf]
  %v58 = vunpack.c.l.b16 %v18
  %v59 = vunpack.c.l.b16 %v19
  %v60 = vunpack.c.l.b16 %v20
  %v61 = vunpack.c.l.b16 %v21
  %v62 = vunpack.c.l.b16 %v22
  %v63 = vunpack.c.l.b16 %v23
  %v64 = vunpack.c.l.b16 %v24
  %v65 = vunpack.c.l.b16 %v25
  %v66 = vunpack.c.l.b16 %v26
  %v67 = vunpack.c.l.b16 %v27
  %v68 = vunpack.c.l.b16 %v28
  %v69 = vunpack.c.l.b16 %v29
  %v70 = vunpack.c.l.b16 %v30
  %v71 = vunpack.c.l.b16 %v31
  %v72 = vunpack.c.l.b16 %v32
  %v73 = vunpack.c.l.b16 %v33
  %v74 = vpack.c.b16 %v59, %v58
  %v75 = vpack.c.b16 %v61, %v60
  %v76 = vpack.c.b16 %v63, %v62
  %v77 = vpack.c.b16 %v65, %v64
  %v78 = vpack.c.b16 %v67, %v66
  %v79 = vpack.c.b16 %v69, %v68
  %v80 = vpack.c.b16 %v71, %v70
  %v81 = vpack.c.b16 %v73, %v72
  %v90 = vunpack.c.l.b16 %v34
  %v91 = vunpack.c.l.b16 %v35
  %v92 = vunpack.c.l.b16 %v36
  %v93 = vunpack.c.l.b16 %v37
  %v94 = vunpack.c.l.b16 %v38
  %v95 = vunpack.c.l.b16 %v39
  %v96 = vunpack.c.l.b16 %v40
  %v97 = vunpack.c.l.b16 %v41
  %v98 = vpack.c.b16 %v91, %v90
  %v99 = vpack.c.b16 %v93, %v92
  %v100 = vpack.c.b16 %v95, %v94
  %v101 = vpack.c.b16 %v97, %v96
  %vm106 = vcmask 523264
  %v108 = vsel %vm106, %v74, 0
  %v111 = vsel %vm106, %v75, 0
  %v114 = vsel %vm106, %v76, 0
  %v117 = vsel %vm106, %v77, 0
  %v120 = vsel %vm106, %v78, 0
  %v123 = vsel %vm106, %v79, 0
  %v126 = vsel %vm106, %v80, 0
  %v129 = vsel %vm106, %v81, 0
  %131 = vmatpush.bf16.msra.mxu0 0
  %132 = vmatpush.bf16.msra.mxu0 0
  %133 = vmatpush.bf16.msra.mxu0 0
  %134 = vmatpush.bf16.msra.mxu0 0
  %135 = vmatpush.bf16.msra.mxu0 %v101
  %136 = vmatpush.bf16.msra.mxu0 %v100
  %137 = vmatpush.bf16.msra.mxu0 %v99
  %138 = vmatpush.bf16.msra.mxu0 %v98
  %139 = vmatmul.bf16.gmra.mxu0 %v108
  %v140 = vpop.f32.mrf.mxu0
  %v141 = vadd.f32 0.0, %v140
  %v142 = vpop.f32.mrf.mxu0
  %v143 = vadd.f32 0.0, %v142
  %144 = vmatmul.bf16.gmra.mxu0 %v111
  %v145 = vpop.f32.mrf.mxu0
  %v146 = vadd.f32 0.0, %v145
  %v147 = vpop.f32.mrf.mxu0
  %v148 = vadd.f32 0.0, %v147
  %149 = vmatmul.bf16.gmra.mxu0 %v114
  %v150 = vpop.f32.mrf.mxu0
  %v151 = vadd.f32 0.0, %v150
  %v152 = vpop.f32.mrf.mxu0
  %v153 = vadd.f32 0.0, %v152
  %154 = vmatmul.bf16.gmra.mxu0 %v117
  %v155 = vpop.f32.mrf.mxu0
  %v156 = vadd.f32 0.0, %v155
  %v157 = vpop.f32.mrf.mxu0
  %v158 = vadd.f32 0.0, %v157
  %159 = vmatmul.bf16.gmra.mxu0 %v120
  %v160 = vpop.f32.mrf.mxu0
  %v161 = vadd.f32 0.0, %v160
  %v162 = vpop.f32.mrf.mxu0
  %v163 = vadd.f32 0.0, %v162
  %164 = vmatmul.bf16.gmra.mxu0 %v123
  %v165 = vpop.f32.mrf.mxu0
  %v166 = vadd.f32 0.0, %v165
  %v167 = vpop.f32.mrf.mxu0
  %v168 = vadd.f32 0.0, %v167
  %169 = vmatmul.bf16.gmra.mxu0 %v126
  %v170 = vpop.f32.mrf.mxu0
  %v171 = vadd.f32 0.0, %v170
  %v172 = vpop.f32.mrf.mxu0
  %v173 = vadd.f32 0.0, %v172
  %174 = vmatmul.bf16.gmra.mxu0 %v129
  %v175 = vpop.f32.mrf.mxu0
  %v176 = vadd.f32 0.0, %v175
  %v177 = vpop.f32.mrf.mxu0
  %v178 = vadd.f32 0.0, %v177
  %179 = vdwg.mxu0
  %v180 = vld [vmem:[%s2] sm:$0x1]
  %v182 = vperm.slane %v180, 0
  %v184 = vmul.f32 %v141, %v182
  %v185 = vmul.f32 %v143, %v182
  %v186 = vmul.f32 %v146, %v182
  %v187 = vmul.f32 %v148, %v182
  %v188 = vmul.f32 %v151, %v182
  %v189 = vmul.f32 %v153, %v182
  %v190 = vmul.f32 %v156, %v182
  %v191 = vmul.f32 %v158, %v182
  %v192 = vmul.f32 %v161, %v182
  %v193 = vmul.f32 %v163, %v182
  %v194 = vmul.f32 %v166, %v182
  %v195 = vmul.f32 %v168, %v182
  %v196 = vmul.f32 %v171, %v182
  %v197 = vmul.f32 %v173, %v182
  %v198 = vmul.f32 %v176, %v182
  %v199 = vmul.f32 %v178, %v182
  %v200 = vld [vmem:[%s3] sm:$0x1]
  %v202 = vperm.slane %v200, 0
  %v204 = vadd.f32 %v184, %v202
  %v205 = vadd.f32 %v185, %v202
  %v206 = vadd.f32 %v186, %v202
  %v207 = vadd.f32 %v187, %v202
  %v208 = vadd.f32 %v188, %v202
  %v209 = vadd.f32 %v189, %v202
  %v210 = vadd.f32 %v190, %v202
  %v211 = vadd.f32 %v191, %v202
  %v212 = vadd.f32 %v192, %v202
  %v213 = vadd.f32 %v193, %v202
  %v214 = vadd.f32 %v194, %v202
  %v215 = vadd.f32 %v195, %v202
  %v216 = vadd.f32 %v196, %v202
  %v217 = vadd.f32 %v197, %v202
  %v218 = vadd.f32 %v198, %v202
  %v219 = vadd.f32 %v199, %v202
  %v220 = vmax.f32 %v204, 0.0
  %v221 = vmax.f32 %v205, 0.0
  %v222 = vmax.f32 %v206, 0.0
  %v223 = vmax.f32 %v207, 0.0
  %v224 = vmax.f32 %v208, 0.0
  %v225 = vmax.f32 %v209, 0.0
  %v226 = vmax.f32 %v210, 0.0
  %v227 = vmax.f32 %v211, 0.0
  %v228 = vmax.f32 %v212, 0.0
  %v229 = vmax.f32 %v213, 0.0
  %v230 = vmax.f32 %v214, 0.0
  %v231 = vmax.f32 %v215, 0.0
  %v232 = vmax.f32 %v216, 0.0
  %v233 = vmax.f32 %v217, 0.0
  %v234 = vmax.f32 %v218, 0.0
  %v235 = vmax.f32 %v219, 0.0
  %v236 = vpack.c.bf16 %v220, %v220
  %v237 = vpack.c.bf16 %v221, %v221
  %v238 = vpack.c.bf16 %v222, %v222
  %v239 = vpack.c.bf16 %v223, %v223
  %v240 = vpack.c.bf16 %v224, %v224
  %v241 = vpack.c.bf16 %v225, %v225
  %v242 = vpack.c.bf16 %v226, %v226
  %v243 = vpack.c.bf16 %v227, %v227
  %v244 = vpack.c.bf16 %v228, %v228
  %v245 = vpack.c.bf16 %v229, %v229
  %v246 = vpack.c.bf16 %v230, %v230
  %v247 = vpack.c.bf16 %v231, %v231
  %v248 = vpack.c.bf16 %v232, %v232
  %v249 = vpack.c.bf16 %v233, %v233
  %v250 = vpack.c.bf16 %v234, %v234
  %v251 = vpack.c.bf16 %v235, %v235
  %252 = vst [vmem:[%s4] sm:$0xf] %v236
  %253 = vst [vmem:[%s4 + $0x4] sm:$0xf] %v237
  %254 = vst [vmem:[%s4 + $0x8] sm:$0xf] %v238
  %255 = vst [vmem:[%s4 + $0xc] sm:$0xf] %v239
  %256 = vst [vmem:[%s4 + $0x10] sm:$0xf] %v240
  %257 = vst [vmem:[%s4 + $0x14] sm:$0xf] %v241
  %258 = vst [vmem:[%s4 + $0x18] sm:$0xf] %v242
  %259 = vst [vmem:[%s4 + $0x1c] sm:$0xf] %v243
  %260 = vst [vmem:[%s4 + $0x20] sm:$0xf] %v244
  %261 = vst [vmem:[%s4 + $0x24] sm:$0xf] %v245
  %262 = vst [vmem:[%s4 + $0x28] sm:$0xf] %v246
  %263 = vst [vmem:[%s4 + $0x2c] sm:$0xf] %v247
  %264 = vst [vmem:[%s4 + $0x30] sm:$0xf] %v248
  %265 = vst [vmem:[%s4 + $0x34] sm:$0xf] %v249
  %266 = vst [vmem:[%s4 + $0x38] sm:$0xf] %v250
  %267 = vst [vmem:[%s4 + $0x3c] sm:$0xf] %v251
  // Predicated region
  $region18: #{generator_forward.6} parent=0 // pred_check
    _
  $region19: #{generator_forward.6} parent=0 // pred_check_branch
    %269 = sbr.rel (0) target = $region21
  $region20: #{generator_forward.6} parent=0 // pred_region
    _
  $region21: #{generator_forward.6} parent=0 // pred_fallthru
    _
  // Predicated region
  $region22: #{generator_forward.6} parent=0 // pred_check
    _
  $region23: #{generator_forward.6} parent=0 // pred_check_branch
    %271 = sbr.rel (0) target = $region25
  $region24: #{generator_forward.6} parent=0 // pred_region
    _
  $region25: #{generator_forward.6} parent=0 // pred_fallthru
    _

// kernel: generator_forward.7
$region0: #{generator_forward.7}
  #allocation0 [shape = 'u32[]', space=smem, size = 0x4, offset = 0x4, fixed_abs, tag = 'smem constant byte address 0x4 - core index']
  #allocation1 [shape = 'u32[72,128]{1,0:T(1,128)}', space=vmem, size = 0x9000, scoped, tag = 'internal scratch']
  %s0 = inlined_call_operand.vmem [shape: bf16[512,32], index: 0, kind: input, shape index: {}]
  %s1 = inlined_call_operand.vmem [shape: bf16[32,128], index: 1, kind: input, shape index: {}]
  %s2 = inlined_call_operand.vmem [shape: f32[1,128], index: 2, kind: input, shape index: {}]
  %s3 = inlined_call_operand.vmem [shape: f32[1,128], index: 3, kind: input, shape index: {}]
  %s4 = inlined_call_operand.vmem [shape: f32[512,128], index: 4, kind: output, shape index: {}]
  %s5 = sld [smem:[#allocation0]]
  $region49: #{generator_forward.7} parent=0
    _
  %s7 = ssub.s32 1, %s5
  %s8 = scalar_select 0, %s7, %s5
  loop: start=0, step=1, limit=4
  $region2: #{generator_forward.7} parent=0 // loop_pre_header
    _
  $region3: #{generator_forward.7} parent=0 // loop_header
    %s10 = sphi 0, %s14
    %p11 = scmp.ge.s32.totalorder %s10, 4
    %s20 = sphi 0, %s22
    %s23 = sphi 0, %s20
    %s24 = sphi 0, %s23
    %s40 = sphi 0, %s24
    %s44 = sphi 0, %s44
    %s46 = sphi 0, %s44
    %s47 = sphi 0, %s46
    %s61 = sphi 0, %s47
    %s65 = sphi 0, %s65
    %s67 = sphi 0, %s65
    %s68 = sphi 0, %s67
    %s82 = sphi 0, %s68
    %s86 = sphi 0, %s86
    %s88 = sphi 0, %s86
    %s89 = sphi 0, %s88
    %s103 = sphi 0, %s89
    %s109 = sphi 0, %s111
    %s112 = sphi 0, %s109
    %s113 = sphi 0, %s112
    %s129 = sphi 0, %s113
  $region4: #{generator_forward.7} parent=0 // loop_header_branch
    %13 = sbr.rel (%p11) target = $region8
  $region5: #{generator_forward.7} parent=0 // loop_body
    %s15 = ssub.s32 %s10, 1
    %s16 = ssub.s32 %s10, 2
    %s17 = sadd.s32 %s10, 1
    %s18 = ssub.s32 %s10, %s17
    %p19 = scmp.eq.s32.totalorder %s18, 0
    %s21 = sadd.s32 %s20, 1
    %s22 = scalar_select %p19, %s20, %s21
    %p25 = pneg %p19
    %p26 = scmp.eq.s32.totalorder %s10, 1
    %p27 = por %p25, %p26
    %p28 = scmp.ne.s32.totalorder %s20, %s23
    %p29 = scmp.eq.s32.totalorder %s10, 0
    %p30 = por %p28, %p29
    %p31 = scmp.ne.s32.totalorder %s20, %s23
    %p32 = scmp.eq.s32.totalorder %s15, 1
    %p33 = por %p31, %p32
    %p34 = scmp.ne.s32.totalorder %s23, %s24
    %p35 = scmp.eq.s32.totalorder %s15, 0
    %p36 = por %p34, %p35
    %p37 = scmp.ne.s32.totalorder %s23, %s24
    %p38 = scmp.eq.s32.totalorder %s16, 1
    %p39 = por %p37, %p38
    %p41 = scmp.ne.s32.totalorder %s24, %s40
    %p42 = scmp.eq.s32.totalorder %s16, 0
    %p43 = por %p41, %p42
    %s45 = sadd.s32 %s44, 1
    %p48 = scmp.eq.s32.totalorder %s10, 1
    %p49 = scmp.ne.s32.totalorder %s44, %s46
    %p50 = scmp.eq.s32.totalorder %s10, 0
    %p51 = por %p49, %p50
    %p52 = scmp.ne.s32.totalorder %s44, %s46
    %p53 = scmp.eq.s32.totalorder %s15, 1
    %p54 = por %p52, %p53
    %p55 = scmp.ne.s32.totalorder %s46, %s47
    %p56 = scmp.eq.s32.totalorder %s15, 0
    %p57 = por %p55, %p56
    %p58 = scmp.ne.s32.totalorder %s46, %s47
    %p59 = scmp.eq.s32.totalorder %s16, 1
    %p60 = por %p58, %p59
    %p62 = scmp.ne.s32.totalorder %s47, %s61
    %p63 = scmp.eq.s32.totalorder %s16, 0
    %p64 = por %p62, %p63
    %s66 = sadd.s32 %s65, 1
    %p69 = scmp.eq.s32.totalorder %s10, 1
    %p70 = scmp.ne.s32.totalorder %s65, %s67
    %p71 = scmp.eq.s32.totalorder %s10, 0
    %p72 = por %p70, %p71
    %p73 = scmp.ne.s32.totalorder %s65, %s67
    %p74 = scmp.eq.s32.totalorder %s15, 1
    %p75 = por %p73, %p74
    %p76 = scmp.ne.s32.totalorder %s67, %s68
    %p77 = scmp.eq.s32.totalorder %s15, 0
    %p78 = por %p76, %p77
    %p79 = scmp.ne.s32.totalorder %s67, %s68
    %p80 = scmp.eq.s32.totalorder %s16, 1
    %p81 = por %p79, %p80
    %p83 = scmp.ne.s32.totalorder %s68, %s82
    %p84 = scmp.eq.s32.totalorder %s16, 0
    %p85 = por %p83, %p84
    %s87 = sadd.s32 %s86, 1
    %p90 = scmp.eq.s32.totalorder %s10, 1
    %p91 = scmp.ne.s32.totalorder %s86, %s88
    %p92 = scmp.eq.s32.totalorder %s10, 0
    %p93 = por %p91, %p92
    %p94 = scmp.ne.s32.totalorder %s86, %s88
    %p95 = scmp.eq.s32.totalorder %s15, 1
    %p96 = por %p94, %p95
    %p97 = scmp.ne.s32.totalorder %s88, %s89
    %p98 = scmp.eq.s32.totalorder %s15, 0
    %p99 = por %p97, %p98
    %p100 = scmp.ne.s32.totalorder %s88, %s89
    %p101 = scmp.eq.s32.totalorder %s16, 1
    %p102 = por %p100, %p101
    %p104 = scmp.ne.s32.totalorder %s89, %s103
    %p105 = scmp.eq.s32.totalorder %s16, 0
    %p106 = por %p104, %p105
    %s107 = ssub.s32 %s10, %s17
    %p108 = scmp.eq.s32.totalorder %s107, 0
    %s110 = sadd.s32 %s109, 1
    %s111 = scalar_select %p108, %s109, %s110
    %p114 = pneg %p108
    %p115 = scmp.eq.s32.totalorder %s10, 1
    %p116 = por %p114, %p115
    %p117 = scmp.ne.s32.totalorder %s109, %s112
    %p118 = scmp.eq.s32.totalorder %s10, 0
    %p119 = por %p117, %p118
    %p120 = scmp.ne.s32.totalorder %s109, %s112
    %p121 = scmp.eq.s32.totalorder %s15, 1
    %p122 = por %p120, %p121
    %p123 = scmp.ne.s32.totalorder %s112, %s113
    %p124 = scmp.eq.s32.totalorder %s15, 0
    %p125 = por %p123, %p124
    %p126 = scmp.ne.s32.totalorder %s112, %s113
    %p127 = scmp.eq.s32.totalorder %s16, 1
    %p128 = por %p126, %p127
    %p130 = scmp.ne.s32.totalorder %s113, %s129
    %p131 = scmp.eq.s32.totalorder %s16, 0
    %p132 = por %p130, %p131
    %p133 = scmp.le.s32.totalorder 1, %s10
    %p134 = scmp.lt.s32.totalorder %s10, 3
    %p135 = pnand %p133, %p134
    %p136 = pneg %p135
    // Predicated region
    $region9: #{generator_forward.7} parent=5 // pred_check
      _
    $region10: #{generator_forward.7} parent=5 // pred_check_branch
      %138 = sbr.rel (%p135) target = $region12
    $region11: #{generator_forward.7} parent=5 // pred_region
      %s139 = ssub.s32 %s10, 1
      // Predicated region
      $region13: #{generator_forward.7} parent=11 // pred_check
        %p140 = pneg %p57
      $region14: #{generator_forward.7} parent=11 // pred_check_branch
        %142 = sbr.rel (%p140) target = $region16
      $region15: #{generator_forward.7} parent=11 // pred_region
        _
      $region16: #{generator_forward.7} parent=11 // pred_fallthru
        _
      // Predicated region
      $region17: #{generator_forward.7} parent=11 // pred_check
        %p143 = pneg %p78
      $region18: #{generator_forward.7} parent=11 // pred_check_branch
        %145 = sbr.rel (%p143) target = $region20
      $region19: #{generator_forward.7} parent=11 // pred_region
        _
      $region20: #{generator_forward.7} parent=11 // pred_fallthru
        _
      // Predicated region
      $region21: #{generator_forward.7} parent=11 // pred_check
        %p146 = pneg %p99
      $region22: #{generator_forward.7} parent=11 // pred_check_branch
        %148 = sbr.rel (%p146) target = $region24
      $region23: #{generator_forward.7} parent=11 // pred_region
        _
      $region24: #{generator_forward.7} parent=11 // pred_fallthru
        _
    $region12: #{generator_forward.7} parent=5 // pred_fallthru
      _
    %p149 = scmp.lt.s32.totalorder %s10, 2
    // Predicated region
    $region25: #{generator_forward.7} parent=5 // pred_check
      %p150 = pneg %p149
    $region26: #{generator_forward.7} parent=5 // pred_check_branch
      %152 = sbr.rel (%p150) target = $region28
    $region27: #{generator_forward.7} parent=5 // pred_region
      // Predicated region
      $region29: #{generator_forward.7} parent=27 // pred_check
        %p153 = pneg %p30
      $region30: #{generator_forward.7} parent=27 // pred_check_branch
        %155 = sbr.rel (%p153) target = $region32
      $region31: #{generator_forward.7} parent=27 // pred_region
        %s156 = smul.u32 32, %s10
        %p157 = scmp.lt.s32.totalorder %s156, 63
        %s158 = scalar_select %p157, %s156, 63
        %s159 = smul.addr %s158, 4
        %s160 = scalar_lea.vmem %s0, %s159
        %s161 = smul.u32 32, %s10
      $region32: #{generator_forward.7} parent=27 // pred_fallthru
        _
    $region28: #{generator_forward.7} parent=5 // pred_fallthru
      _
    %p162 = scmp.le.s32.totalorder 1, %s10
    %p163 = scmp.lt.s32.totalorder %s10, 3
    %p164 = pnand %p162, %p163
    %p165 = pneg %p164
    // Predicated region
    $region33: #{generator_forward.7} parent=5 // pred_check
      _
    $region34: #{generator_forward.7} parent=5 // pred_check_branch
      %167 = sbr.rel (%p164) target = $region36
    $region35: #{generator_forward.7} parent=5 // pred_region
      %s168 = ssub.s32 %s10, 1
      %s169 = smul.u32 32, %s15
      %p170 = scmp.lt.s32.totalorder %s169, 63
      %s171 = scalar_select %p170, %s169, 63
      %s172 = smul.addr %s171, 4
      %s173 = scalar_lea.vmem %s0, %s172
      %p174 = pneg %p36
      %p175 = pneg %p33
      %p176 = pneg %p57
      %p177 = pneg %p54
      %p178 = pneg %p78
      %p179 = pneg %p75
      %p180 = pneg %p99
      %p181 = pneg %p96
      %p182 = pneg %p125
      %p183 = pneg %p122
      %s184 = smul.u32 32, %s15
      %p185 = scmp.lt.s32.totalorder %s184, 63
      %s186 = scalar_select %p185, %s184, 63
      %s187 = smul.addr %s186, 8
      %s188 = scalar_lea.vmem %s4, %s187
      %s189 = smul.u32 32, %s15
      %p190 = scmp.lt.s32.totalorder %s189, 63
      %s191 = scalar_select %p190, %s189, 63
      %s192 = smul.addr %s191, 4
      %s193 = scalar_lea.vmem %s0, %s192
      %s194 = smul.u32 32, %s15
      %s195 = smul.u32 32, %s15
      %p196 = scmp.lt.s32.totalorder %s195, 63
      %s197 = scalar_select %p196, %s195, 63
      %s198 = smul.addr %s197, 8
      %s199 = scalar_lea.vmem %s4, %s198
      %s200 = smul.u32 32, %s15
      %v202 = vld [vmem:[%s193] sm:$0xf]
      %v203 = vld [vmem:[%s193 + $0x4] sm:$0xf]
      %v204 = vld [vmem:[%s193 + $0x8] sm:$0xf]
      %v205 = vld [vmem:[%s193 + $0xc] sm:$0xf]
      %v206 = vld [vmem:[%s193 + $0x10] sm:$0xf]
      %v207 = vld [vmem:[%s193 + $0x14] sm:$0xf]
      %v208 = vld [vmem:[%s193 + $0x18] sm:$0xf]
      %v209 = vld [vmem:[%s193 + $0x1c] sm:$0xf]
      %v210 = vld [vmem:[%s193 + $0x20] sm:$0xf]
      %v211 = vld [vmem:[%s193 + $0x24] sm:$0xf]
      %v212 = vld [vmem:[%s193 + $0x28] sm:$0xf]
      %v213 = vld [vmem:[%s193 + $0x2c] sm:$0xf]
      %v214 = vld [vmem:[%s193 + $0x30] sm:$0xf]
      %v215 = vld [vmem:[%s193 + $0x34] sm:$0xf]
      %v216 = vld [vmem:[%s193 + $0x38] sm:$0xf]
      %v217 = vld [vmem:[%s193 + $0x3c] sm:$0xf]
      %v218 = vld [vmem:[%s193 + $0x40] sm:$0xf]
      %v219 = vld [vmem:[%s193 + $0x44] sm:$0xf]
      %v220 = vld [vmem:[%s193 + $0x48] sm:$0xf]
      %v221 = vld [vmem:[%s193 + $0x4c] sm:$0xf]
      %v222 = vld [vmem:[%s193 + $0x50] sm:$0xf]
      %v223 = vld [vmem:[%s193 + $0x54] sm:$0xf]
      %v224 = vld [vmem:[%s193 + $0x58] sm:$0xf]
      %v225 = vld [vmem:[%s193 + $0x5c] sm:$0xf]
      %v226 = vld [vmem:[%s193 + $0x60] sm:$0xf]
      %v227 = vld [vmem:[%s193 + $0x64] sm:$0xf]
      %v228 = vld [vmem:[%s193 + $0x68] sm:$0xf]
      %v229 = vld [vmem:[%s193 + $0x6c] sm:$0xf]
      %v230 = vld [vmem:[%s193 + $0x70] sm:$0xf]
      %v231 = vld [vmem:[%s193 + $0x74] sm:$0xf]
      %v232 = vld [vmem:[%s193 + $0x78] sm:$0xf]
      %v233 = vld [vmem:[%s193 + $0x7c] sm:$0xf]
      %v234 = vld [vmem:[%s1] sm:$0xf]
      %v235 = vld [vmem:[%s1 + $0x4] sm:$0xf]
      %v236 = vld [vmem:[%s1 + $0x8] sm:$0xf]
      %v237 = vld [vmem:[%s1 + $0xc] sm:$0xf]
      %v270 = vunpack.c.l.b16 %v202
      %v271 = vunpack.c.l.b16 %v203
      %v272 = vunpack.c.l.b16 %v204
      %v273 = vunpack.c.l.b16 %v205
      %v274 = vunpack.c.l.b16 %v206
      %v275 = vunpack.c.l.b16 %v207
      %v276 = vunpack.c.l.b16 %v208
      %v277 = vunpack.c.l.b16 %v209
      %v278 = vunpack.c.l.b16 %v210
      %v279 = vunpack.c.l.b16 %v211
      %v280 = vunpack.c.l.b16 %v212
      %v281 = vunpack.c.l.b16 %v213
      %v282 = vunpack.c.l.b16 %v214
      %v283 = vunpack.c.l.b16 %v215
      %v284 = vunpack.c.l.b16 %v216
      %v285 = vunpack.c.l.b16 %v217
      %v286 = vunpack.c.l.b16 %v218
      %v287 = vunpack.c.l.b16 %v219
      %v288 = vunpack.c.l.b16 %v220
      %v289 = vunpack.c.l.b16 %v221
      %v290 = vunpack.c.l.b16 %v222
      %v291 = vunpack.c.l.b16 %v223
      %v292 = vunpack.c.l.b16 %v224
      %v293 = vunpack.c.l.b16 %v225
      %v294 = vunpack.c.l.b16 %v226
      %v295 = vunpack.c.l.b16 %v227
      %v296 = vunpack.c.l.b16 %v228
      %v297 = vunpack.c.l.b16 %v229
      %v298 = vunpack.c.l.b16 %v230
      %v299 = vunpack.c.l.b16 %v231
      %v300 = vunpack.c.l.b16 %v232
      %v301 = vunpack.c.l.b16 %v233
      %v302 = vpack.c.b16 %v271, %v270
      %v303 = vpack.c.b16 %v273, %v272
      %v304 = vpack.c.b16 %v275, %v274
      %v305 = vpack.c.b16 %v277, %v276
      %v306 = vpack.c.b16 %v279, %v278
      %v307 = vpack.c.b16 %v281, %v280
      %v308 = vpack.c.b16 %v283, %v282
      %v309 = vpack.c.b16 %v285, %v284
      %v310 = vpack.c.b16 %v287, %v286
      %v311 = vpack.c.b16 %v289, %v288
      %v312 = vpack.c.b16 %v291, %v290
      %v313 = vpack.c.b16 %v293, %v292
      %v314 = vpack.c.b16 %v295, %v294
      %v315 = vpack.c.b16 %v297, %v296
      %v316 = vpack.c.b16 %v299, %v298
      %v317 = vpack.c.b16 %v301, %v300
      %v322 = vunpack.c.l.b16 %v234
      %v323 = vunpack.c.l.b16 %v235
      %v324 = vunpack.c.l.b16 %v236
      %v325 = vunpack.c.l.b16 %v237
      %v326 = vpack.c.b16 %v323, %v322
      %v327 = vpack.c.b16 %v325, %v324
      %vm330 = vcmask 261120
      %v332 = vsel %vm330, %v302, 0
      %v335 = vsel %vm330, %v303, 0
      %v338 = vsel %vm330, %v304, 0
      %v341 = vsel %vm330, %v305, 0
      %v344 = vsel %vm330, %v306, 0
      %v347 = vsel %vm330, %v307, 0
      %v350 = vsel %vm330, %v308, 0
      %v353 = vsel %vm330, %v309, 0
      %v356 = vsel %vm330, %v310, 0
      %v359 = vsel %vm330, %v311, 0
      %v362 = vsel %vm330, %v312, 0
      %v365 = vsel %vm330, %v313, 0
      %v368 = vsel %vm330, %v314, 0
      %v371 = vsel %vm330, %v315, 0
      %v374 = vsel %vm330, %v316, 0
      %v377 = vsel %vm330, %v317, 0
      %379 = vmatpush.bf16.msra.mxu0 0
      %380 = vmatpush.bf16.msra.mxu0 0
      %381 = vmatpush.bf16.msra.mxu0 0
      %382 = vmatpush.bf16.msra.mxu0 0
      %383 = vmatpush.bf16.msra.mxu0 0
      %384 = vmatpush.bf16.msra.mxu0 0
      %385 = vmatpush.bf16.msra.mxu0 %v327
      %386 = vmatpush.bf16.msra.mxu0 %v326
      %387 = vmatmul.bf16.gmra.mxu0 %v332
      %v388 = vpop.f32.mrf.mxu0
      %v389 = vadd.f32 0.0, %v388
      %v390 = vpop.f32.mrf.mxu0
      %v391 = vadd.f32 0.0, %v390
      %392 = vmatmul.bf16.gmra.mxu0 %v335
      %v393 = vpop.f32.mrf.mxu0
      %v394 = vadd.f32 0.0, %v393
      %v395 = vpop.f32.mrf.mxu0
      %v396 = vadd.f32 0.0, %v395
      %397 = vmatmul.bf16.gmra.mxu0 %v338
      %v398 = vpop.f32.mrf.mxu0
      %v399 = vadd.f32 0.0, %v398
      %v400 = vpop.f32.mrf.mxu0
      %v401 = vadd.f32 0.0, %v400
      %402 = vmatmul.bf16.gmra.mxu0 %v341
      %v403 = vpop.f32.mrf.mxu0
      %v404 = vadd.f32 0.0, %v403
      %v405 = vpop.f32.mrf.mxu0
      %v406 = vadd.f32 0.0, %v405
      %407 = vmatmul.bf16.gmra.mxu0 %v344
      %v408 = vpop.f32.mrf.mxu0
      %v409 = vadd.f32 0.0, %v408
      %v410 = vpop.f32.mrf.mxu0
      %v411 = vadd.f32 0.0, %v410
      %412 = vmatmul.bf16.gmra.mxu0 %v347
      %v413 = vpop.f32.mrf.mxu0
      %v414 = vadd.f32 0.0, %v413
      %v415 = vpop.f32.mrf.mxu0
      %v416 = vadd.f32 0.0, %v415
      %417 = vmatmul.bf16.gmra.mxu0 %v350
      %v418 = vpop.f32.mrf.mxu0
      %v419 = vadd.f32 0.0, %v418
      %v420 = vpop.f32.mrf.mxu0
      %v421 = vadd.f32 0.0, %v420
      %422 = vmatmul.bf16.gmra.mxu0 %v353
      %v423 = vpop.f32.mrf.mxu0
      %v424 = vadd.f32 0.0, %v423
      %v425 = vpop.f32.mrf.mxu0
      %v426 = vadd.f32 0.0, %v425
      %427 = vmatmul.bf16.gmra.mxu0 %v356
      %v428 = vpop.f32.mrf.mxu0
      %v429 = vadd.f32 0.0, %v428
      %v430 = vpop.f32.mrf.mxu0
      %v431 = vadd.f32 0.0, %v430
      %432 = vmatmul.bf16.gmra.mxu0 %v359
      %v433 = vpop.f32.mrf.mxu0
      %v434 = vadd.f32 0.0, %v433
      %v435 = vpop.f32.mrf.mxu0
      %v436 = vadd.f32 0.0, %v435
      %437 = vmatmul.bf16.gmra.mxu0 %v362
      %v438 = vpop.f32.mrf.mxu0
      %v439 = vadd.f32 0.0, %v438
      %v440 = vpop.f32.mrf.mxu0
      %v441 = vadd.f32 0.0, %v440
      %442 = vmatmul.bf16.gmra.mxu0 %v365
      %v443 = vpop.f32.mrf.mxu0
      %v444 = vadd.f32 0.0, %v443
      %v445 = vpop.f32.mrf.mxu0
      %v446 = vadd.f32 0.0, %v445
      %447 = vmatmul.bf16.gmra.mxu0 %v368
      %v448 = vpop.f32.mrf.mxu0
      %v449 = vadd.f32 0.0, %v448
      %v450 = vpop.f32.mrf.mxu0
      %v451 = vadd.f32 0.0, %v450
      %452 = vmatmul.bf16.gmra.mxu0 %v371
      %v453 = vpop.f32.mrf.mxu0
      %v454 = vadd.f32 0.0, %v453
      %v455 = vpop.f32.mrf.mxu0
      %v456 = vadd.f32 0.0, %v455
      %457 = vmatmul.bf16.gmra.mxu0 %v374
      %v458 = vpop.f32.mrf.mxu0
      %v459 = vadd.f32 0.0, %v458
      %v460 = vpop.f32.mrf.mxu0
      %v461 = vadd.f32 0.0, %v460
      %462 = vmatmul.bf16.gmra.mxu0 %v377
      %v463 = vpop.f32.mrf.mxu0
      %v464 = vadd.f32 0.0, %v463
      %v465 = vpop.f32.mrf.mxu0
      %v466 = vadd.f32 0.0, %v465
      %467 = vdwg.mxu0
      %v468 = vld [vmem:[%s2] sm:$0x1]
      %v470 = vperm.slane %v468, 0
      %v472 = vmul.f32 %v389, %v470
      %v473 = vmul.f32 %v391, %v470
      %v474 = vmul.f32 %v394, %v470
      %v475 = vmul.f32 %v396, %v470
      %v476 = vmul.f32 %v399, %v470
      %v477 = vmul.f32 %v401, %v470
      %v478 = vmul.f32 %v404, %v470
      %v479 = vmul.f32 %v406, %v470
      %v480 = vmul.f32 %v409, %v470
      %v481 = vmul.f32 %v411, %v470
      %v482 = vmul.f32 %v414, %v470
      %v483 = vmul.f32 %v416, %v470
      %v484 = vmul.f32 %v419, %v470
      %v485 = vmul.f32 %v421, %v470
      %v486 = vmul.f32 %v424, %v470
      %v487 = vmul.f32 %v426, %v470
      %v488 = vmul.f32 %v429, %v470
      %v489 = vmul.f32 %v431, %v470
      %v490 = vmul.f32 %v434, %v470
      %v491 = vmul.f32 %v436, %v470
      %v492 = vmul.f32 %v439, %v470
      %v493 = vmul.f32 %v441, %v470
      %v494 = vmul.f32 %v444, %v470
      %v495 = vmul.f32 %v446, %v470
      %v496 = vmul.f32 %v449, %v470
      %v497 = vmul.f32 %v451, %v470
      %v498 = vmul.f32 %v454, %v470
      %v499 = vmul.f32 %v456, %v470
      %v500 = vmul.f32 %v459, %v470
      %v501 = vmul.f32 %v461, %v470
      %v502 = vmul.f32 %v464, %v470
      %v503 = vmul.f32 %v466, %v470
      %v504 = vld [vmem:[%s3] sm:$0x1]
      %v506 = vperm.slane %v504, 0
      %v508 = vadd.f32 %v472, %v506
      %v509 = vadd.f32 %v473, %v506
      %v510 = vadd.f32 %v474, %v506
      %v511 = vadd.f32 %v475, %v506
      %v512 = vadd.f32 %v476, %v506
      %v513 = vadd.f32 %v477, %v506
      %v514 = vadd.f32 %v478, %v506
      %v515 = vadd.f32 %v479, %v506
      %v516 = vadd.f32 %v480, %v506
      %v517 = vadd.f32 %v481, %v506
      %v518 = vadd.f32 %v482, %v506
      %v519 = vadd.f32 %v483, %v506
      %v520 = vadd.f32 %v484, %v506
      %v521 = vadd.f32 %v485, %v506
      %v522 = vadd.f32 %v486, %v506
      %v523 = vadd.f32 %v487, %v506
      %v524 = vadd.f32 %v488, %v506
      %v525 = vadd.f32 %v489, %v506
      %v526 = vadd.f32 %v490, %v506
      %v527 = vadd.f32 %v491, %v506
      %v528 = vadd.f32 %v492, %v506
      %v529 = vadd.f32 %v493, %v506
      %v530 = vadd.f32 %v494, %v506
      %v531 = vadd.f32 %v495, %v506
      %v532 = vadd.f32 %v496, %v506
      %v533 = vadd.f32 %v497, %v506
      %v534 = vadd.f32 %v498, %v506
      %v535 = vadd.f32 %v499, %v506
      %v536 = vadd.f32 %v500, %v506
      %v537 = vadd.f32 %v501, %v506
      %v538 = vadd.f32 %v502, %v506
      %v539 = vadd.f32 %v503, %v506
      %v540 = vtanh.pop %v508
      %v541 = vtanh.pop %v509
      %v542 = vtanh.pop %v510
      %v543 = vtanh.pop %v511
      %v544 = vtanh.pop %v512
      %v545 = vtanh.pop %v513
      %v546 = vtanh.pop %v514
      %v547 = vtanh.pop %v515
      %v548 = vtanh.pop %v516
      %v549 = vtanh.pop %v517
      %v550 = vtanh.pop %v518
      %v551 = vtanh.pop %v519
      %v552 = vtanh.pop %v520
      %v553 = vtanh.pop %v521
      %v554 = vtanh.pop %v522
      %v555 = vtanh.pop %v523
      %v556 = vtanh.pop %v524
      %v557 = vtanh.pop %v525
      %v558 = vtanh.pop %v526
      %v559 = vtanh.pop %v527
      %v560 = vtanh.pop %v528
      %v561 = vtanh.pop %v529
      %v562 = vtanh.pop %v530
      %v563 = vtanh.pop %v531
      %v564 = vtanh.pop %v532
      %v565 = vtanh.pop %v533
      %v566 = vtanh.pop %v534
      %v567 = vtanh.pop %v535
      %v568 = vtanh.pop %v536
      %v569 = vtanh.pop %v537
      %v570 = vtanh.pop %v538
      %v571 = vtanh.pop %v539
      %572 = vst [vmem:[%s199] sm:$0xff] %v540
      %573 = vst [vmem:[%s199 + $0x8] sm:$0xff] %v541
      %574 = vst [vmem:[%s199 + $0x10] sm:$0xff] %v542
      %575 = vst [vmem:[%s199 + $0x18] sm:$0xff] %v543
      %576 = vst [vmem:[%s199 + $0x20] sm:$0xff] %v544
      %577 = vst [vmem:[%s199 + $0x28] sm:$0xff] %v545
      %578 = vst [vmem:[%s199 + $0x30] sm:$0xff] %v546
      %579 = vst [vmem:[%s199 + $0x38] sm:$0xff] %v547
      %580 = vst [vmem:[%s199 + $0x40] sm:$0xff] %v548
      %581 = vst [vmem:[%s199 + $0x48] sm:$0xff] %v549
      %582 = vst [vmem:[%s199 + $0x50] sm:$0xff] %v550
      %583 = vst [vmem:[%s199 + $0x58] sm:$0xff] %v551
      %584 = vst [vmem:[%s199 + $0x60] sm:$0xff] %v552
      %585 = vst [vmem:[%s199 + $0x68] sm:$0xff] %v553
      %586 = vst [vmem:[%s199 + $0x70] sm:$0xff] %v554
      %587 = vst [vmem:[%s199 + $0x78] sm:$0xff] %v555
      %588 = vst [vmem:[%s199 + $0x80] sm:$0xff] %v556
      %589 = vst [vmem:[%s199 + $0x88] sm:$0xff] %v557
      %590 = vst [vmem:[%s199 + $0x90] sm:$0xff] %v558
      %591 = vst [vmem:[%s199 + $0x98] sm:$0xff] %v559
      %592 = vst [vmem:[%s199 + $0xa0] sm:$0xff] %v560
      %593 = vst [vmem:[%s199 + $0xa8] sm:$0xff] %v561
      %594 = vst [vmem:[%s199 + $0xb0] sm:$0xff] %v562
      %595 = vst [vmem:[%s199 + $0xb8] sm:$0xff] %v563
      %596 = vst [vmem:[%s199 + $0xc0] sm:$0xff] %v564
      %597 = vst [vmem:[%s199 + $0xc8] sm:$0xff] %v565
      %598 = vst [vmem:[%s199 + $0xd0] sm:$0xff] %v566
      %599 = vst [vmem:[%s199 + $0xd8] sm:$0xff] %v567
      %600 = vst [vmem:[%s199 + $0xe0] sm:$0xff] %v568
      %601 = vst [vmem:[%s199 + $0xe8] sm:$0xff] %v569
      %602 = vst [vmem:[%s199 + $0xf0] sm:$0xff] %v570
      %603 = vst [vmem:[%s199 + $0xf8] sm:$0xff] %v571
      %s604 = smul.u32 32, %s15
      %p605 = scmp.lt.s32.totalorder %s604, 63
      %s606 = scalar_select %p605, %s604, 63
      %s607 = smul.addr %s606, 8
      %s608 = scalar_lea.vmem %s4, %s607
      // Predicated region
      $region37: #{generator_forward.7} parent=35 // pred_check
        %p609 = pneg %p122
      $region38: #{generator_forward.7} parent=35 // pred_check_branch
        %611 = sbr.rel (%p609) target = $region40
      $region39: #{generator_forward.7} parent=35 // pred_region
        %s612 = smul.u32 32, %s15
      $region40: #{generator_forward.7} parent=35 // pred_fallthru
        _
    $region36: #{generator_forward.7} parent=5 // pred_fallthru
      _
    %p613 = scmp.le.s32.totalorder 2, %s10
    // Predicated region
    $region41: #{generator_forward.7} parent=5 // pred_check
      %p614 = pneg %p613
    $region42: #{generator_forward.7} parent=5 // pred_check_branch
      %616 = sbr.rel (%p614) target = $region44
    $region43: #{generator_forward.7} parent=5 // pred_region
      %s617 = ssub.s32 %s10, 2
      // Predicated region
      $region45: #{generator_forward.7} parent=43 // pred_check
        %p618 = pneg %p128
      $region46: #{generator_forward.7} parent=43 // pred_check_branch
        %620 = sbr.rel (%p618) target = $region48
      $region47: #{generator_forward.7} parent=43 // pred_region
        %s621 = smul.u32 32, %s16
        %p622 = scmp.lt.s32.totalorder %s621, 63
        %s623 = scalar_select %p622, %s621, 63
        %s624 = smul.addr %s623, 8
        %s625 = scalar_lea.vmem %s4, %s624
      $region48: #{generator_forward.7} parent=43 // pred_fallthru
        _
    $region44: #{generator_forward.7} parent=5 // pred_fallthru
      _
  $region6: #{generator_forward.7} parent=0 // loop_footer
    %s14 = sadd.s32 1, %s10
  $region7: #{generator_forward.7} parent=0 // loop_footer_branch
    %9 = sbr.rel target = $region3
  $region8: #{generator_forward.7} parent=0 // loop_exit
    _

</llo_original>
